<compile_context>
chip_gen: v6e
topology: v6e:2x2x1
jax: 0.10.0
libtpu: 0.0.40
codegen_flags: <defaults>
</compile_context>

<pallas_src>
import math

import jax
import jax.numpy as jnp
from jax.experimental import pallas as pl
from jax.experimental.pallas import tpu as pltpu

# ----------------------------- model config ---------------------------------
VOCAB = 30          # ProtBert vocab is 30
TYPE_VOCAB = 2
MAX_POS = 16
HIDDEN = 32
NUM_HEADS = 2
HEAD_DIM = HIDDEN // NUM_HEADS
NUM_LAYERS = 2
INTERMEDIATE = 64
LN_EPS = 1e-12

BATCH = 2
SEQ = 8


# ------------------------------ kernel helpers -------------------------------
def _layernorm(v, gamma, beta, eps=LN_EPS):
    mu = jnp.mean(v, axis=-1, keepdims=True)
    var = jnp.mean((v - mu) * (v - mu), axis=-1, keepdims=True)
    return (v - mu) * jax.lax.rsqrt(var + eps) * gamma + beta


def _gelu(v):
    # TODO(synk): BERT default is exact (erf) GELU; tanh approximation used here.
    c = math.sqrt(2.0 / math.pi)
    return 0.5 * v * (1.0 + jnp.tanh(c * (v + 0.044715 * v * v * v)))


# --------------------------- fused encoder kernel -----------------------------
# grid = (NUM_LAYERS,), "arbitrary".  o_ref is the resident activation (BS, H):
#   step 0: o_ref <- LayerNorm(embeddings); then every step applies one layer
#   in-place.  After the last step the output block is written back to HBM once.
def fused_bert_kernel(emb_ref, bias_ref, embln_ref,
                      wqkv_ref, bqkv_ref, wo_ref, w1_ref, b1_ref, w2_ref, vec_ref,
                      o_ref):
    @pl.when(pl.program_id(0) == 0)
    def _():
        o_ref[...] = _layernorm(emb_ref[...], embln_ref[0:1, :], embln_ref[1:2, :])

    x = o_ref[...]                       # (BS, H) resident activation
    bias = bias_ref[...]                 # (BS, BS) block-diag batch + padding bias

    # packed per-layer small vectors: rows = [bo, ln1_g, ln1_b, b2, ln2_g, ln2_b]
    vec = vec_ref[0]                     # (6, H)
    bo, ln1_g, ln1_b = vec[0:1, :], vec[1:2, :], vec[2:3, :]
    b2, ln2_g, ln2_b = vec[3:4, :], vec[4:5, :], vec[5:6, :]

    # ---- fused QKV projection: one MXU matmul over all B*S rows ----
    qkv = jnp.dot(x, wqkv_ref[0], preferred_element_type=jnp.float32) + bqkv_ref[0]

    scale = 1.0 / math.sqrt(HEAD_DIM)
    ctx_parts = []
    for h in range(NUM_HEADS):           # static unroll; NUM_HEADS=2 at toy size
        qh = qkv[:, h * HEAD_DIM:(h + 1) * HEAD_DIM]
        kh = qkv[:, HIDDEN + h * HEAD_DIM:HIDDEN + (h + 1) * HEAD_DIM]
        vh = qkv[:, 2 * HIDDEN + h * HEAD_DIM:2 * HIDDEN + (h + 1) * HEAD_DIM]
        s = jnp.dot(qh, kh.T, preferred_element_type=jnp.float32) * scale + bias
        s = s - jnp.max(s, axis=-1, keepdims=True)
        p = jnp.exp(s)
        p = p * pl.reciprocal(jnp.sum(p, axis=-1, keepdims=True), approx=True)
        ctx_parts.append(jnp.dot(p, vh, preferred_element_type=jnp.float32))
    ctx = jnp.concatenate(ctx_parts, axis=-1)                      # (BS, H)

    attn = jnp.dot(ctx, wo_ref[0], preferred_element_type=jnp.float32) + bo
    h1 = _layernorm(x + attn, ln1_g, ln1_b)

    inter = _gelu(jnp.dot(h1, w1_ref[0], preferred_element_type=jnp.float32)
                  + b1_ref[0])
    ffn = jnp.dot(inter, w2_ref[0], preferred_element_type=jnp.float32) + b2
    o_ref[...] = _layernorm(h1 + ffn, ln2_g, ln2_b).astype(o_ref.dtype)


def fused_bert_forward(emb_flat, bias, params):
    """emb_flat: (B*S, H) summed embeddings; bias: (B*S, B*S) additive mask."""
    BS, H = emb_flat.shape
    L = NUM_LAYERS

    def resident(shape):
        return pl.BlockSpec(shape, lambda l, _n=len(shape): (0,) * _n)

    def per_layer(shape):
        return pl.BlockSpec((1,) + tuple(shape[1:]),
                            lambda l, _n=len(shape): (l,) + (0,) * (_n - 1))

    layer_arrays = [params["wqkv"], params["bqkv"], params["wo"],
                    params["w1"], params["b1"], params["w2"], params["vecs"]]

    return pl.pallas_call(
        fused_bert_kernel,
        out_shape=jax.ShapeDtypeStruct((BS, H), jnp.float32),
        grid=(L,),
        in_specs=[
            resident(emb_flat.shape),          # embeddings (fetched once)
            resident(bias.shape),              # attention bias (fetched once)
            resident(params["emb_ln"].shape),  # embedding LN gamma/beta, packed
            *[per_layer(a.shape) for a in layer_arrays],
        ],
        out_specs=pl.BlockSpec((BS, H), lambda l: (0, 0)),   # resident accumulator
        compiler_params=pltpu.CompilerParams(
            dimension_semantics=("arbitrary",)),
    )(emb_flat, bias, params["emb_ln"], *layer_arrays)


# ------------------------------ parameter init --------------------------------
def init_params(key):
    def normal(key, shape, scale=0.02):
        return scale * jax.random.normal(key, shape, dtype=jnp.float32)

    L, H, I = NUM_LAYERS, HIDDEN, INTERMEDIATE
    keys = jax.random.split(key, 3 + 4)
    ki = iter(keys)

    # per-layer small vectors packed: [bo, ln1_g, ln1_b, b2, ln2_g, ln2_b]
    vec_layer = jnp.stack([
        jnp.zeros((H,), jnp.float32),   # bo
        jnp.ones((H,), jnp.float32),    # ln1 gamma
        jnp.zeros((H,), jnp.float32),   # ln1 beta
        jnp.zeros((H,), jnp.float32),   # b2
        jnp.ones((H,), jnp.float32),    # ln2 gamma
        jnp.zeros((H,), jnp.float32),   # ln2 beta
    ], axis=0)                          # (6, H)

    params = {
        "word_emb": normal(next(ki), (VOCAB, H)),
        "pos_emb": normal(next(ki), (MAX_POS, H)),
        "type_emb": normal(next(ki), (TYPE_VOCAB, H)),
        "emb_ln": jnp.stack([jnp.ones((H,), jnp.float32),
                             jnp.zeros((H,), jnp.float32)], axis=0),   # (2, H)
        # stacked per-layer weights (leading layer axis)
        "wqkv": normal(next(ki), (L, H, 3 * H)),      # packed Wq|Wk|Wv
        "bqkv": jnp.zeros((L, 1, 3 * H), jnp.float32),
        "wo": normal(next(ki), (L, H, H)),
        "w1": normal(next(ki), (L, H, I)),
        "b1": jnp.zeros((L, 1, I), jnp.float32),
        "w2": normal(next(ki), (L, I, H)),
        "vecs": jnp.tile(vec_layer[None], (L, 1, 1)),  # (L, 6, H)
    }
    return params


# ------------------------------- forward pass ---------------------------------
def protbert_classifier_forward(params, input_ids, attention_mask):
    """Returns last_hidden_state, shape (B, S, HIDDEN), dtype float32."""
    B, S = input_ids.shape
    # Embedding gather (glue, plain JAX)
    emb = (params["word_emb"][input_ids]
           + params["pos_emb"][:S][None, :, :]
           + params["type_emb"][0][None, None, :])            # (B, S, H)
    emb_flat = emb.reshape(B * S, HIDDEN)

    # Additive attention bias over flattened rows: a query may only attend to keys
    # of its own batch element (block diagonal) that are not padding.
    key_valid = attention_mask.astype(jnp.float32).reshape(1, B * S)   # (1, BS)
    same_batch = jnp.kron(jnp.eye(B, dtype=jnp.float32),
                          jnp.ones((S, S), jnp.float32))               # (BS, BS)
    attend = same_batch * key_valid
    bias = (1.0 - attend) * (-10000.0)

    out_flat = fused_bert_forward(emb_flat, bias, params)              # (BS, H)
    return out_flat.reshape(B, S, HIDDEN)   # last_hidden_state


# ----------------------------------- main --------------------------------------
if __name__ == "__main__":
    key = jax.random.PRNGKey(0)
    pkey, dkey = jax.random.split(key)
    params = init_params(pkey)

    input_ids = jax.random.randint(dkey, (BATCH, SEQ), 0, VOCAB, dtype=jnp.int32)
    # first sequence fully valid, second sequence padded after position 5
    attention_mask = jnp.array(
        [[1] * SEQ,
         [1] * 5 + [0] * (SEQ - 5)], dtype=jnp.int32)

    out = protbert_classifier_forward(params, input_ids, attention_mask)
    out = jax.block_until_ready(out)

    assert out.shape == (BATCH, SEQ, HIDDEN)
    assert out.dtype == jnp.float32
    print("KERNEL_OK")
</pallas_src>

<mosaic_0001>
module attributes {stable_mosaic.version = 11 : i64} {
  func.func @fused_bert_kernel(%arg0: i32, %arg1: memref<16x32xf32, #tpu.memory_space<vmem>>, %arg2: memref<16x16xf32, #tpu.memory_space<vmem>>, %arg3: memref<2x32xf32, #tpu.memory_space<vmem>>, %arg4: memref<1x32x96xf32, #tpu.memory_space<vmem>>, %arg5: memref<1x1x96xf32, #tpu.memory_space<vmem>>, %arg6: memref<1x32x32xf32, #tpu.memory_space<vmem>>, %arg7: memref<1x32x64xf32, #tpu.memory_space<vmem>>, %arg8: memref<1x1x64xf32, #tpu.memory_space<vmem>>, %arg9: memref<1x64x32xf32, #tpu.memory_space<vmem>>, %arg10: memref<1x6x32xf32, #tpu.memory_space<vmem>>, %arg11: memref<16x32xf32, #tpu.memory_space<vmem>>) attributes {dimension_semantics = [#tpu.dimension_semantics<arbitrary>], iteration_bounds = array<i64: 2>, scalar_prefetch = 0 : i64, scratch_operands = 0 : i64, tpu.core_type = #tpu.core_type<tc>, window_params = [{pipeline_mode = #tpu.pipeline_mode<synchronous>, transform_indices = @transform_0, window_bounds = array<i64: 16, 32>}, {pipeline_mode = #tpu.pipeline_mode<synchronous>, transform_indices = @transform_1, window_bounds = array<i64: 16, 16>}, {pipeline_mode = #tpu.pipeline_mode<synchronous>, transform_indices = @transform_2, window_bounds = array<i64: 2, 32>}, {transform_indices = @transform_3, window_bounds = array<i64: 1, 32, 96>}, {transform_indices = @transform_4, window_bounds = array<i64: 1, 1, 96>}, {transform_indices = @transform_5, window_bounds = array<i64: 1, 32, 32>}, {transform_indices = @transform_6, window_bounds = array<i64: 1, 32, 64>}, {transform_indices = @transform_7, window_bounds = array<i64: 1, 1, 64>}, {transform_indices = @transform_8, window_bounds = array<i64: 1, 64, 32>}, {transform_indices = @transform_9, window_bounds = array<i64: 1, 6, 32>}, {pipeline_mode = #tpu.pipeline_mode<synchronous>, transform_indices = @transform_10, window_bounds = array<i64: 16, 32>}]} {
    %c0_i32 = arith.constant 0 : i32
    %0 = arith.cmpi eq, %arg0, %c0_i32 : i32
    %1 = arith.extui %0 : i1 to i32
    %c0_i32_0 = arith.constant 0 : i32
    %2 = arith.cmpi ne, %1, %c0_i32_0 : i32
    scf.if %2 {
      %c0_54 = arith.constant 0 : index
      %c0_55 = arith.constant 0 : index
      %140 = vector.load %arg1[%c0_54, %c0_55] : memref<16x32xf32, #tpu.memory_space<vmem>>, vector<16x32xf32>
      %c0_56 = arith.constant 0 : index
      %c0_57 = arith.constant 0 : index
      %141 = vector.load %arg3[%c0_56, %c0_57] : memref<2x32xf32, #tpu.memory_space<vmem>>, vector<1x32xf32>
      %c1 = arith.constant 1 : index
      %c0_58 = arith.constant 0 : index
      %142 = vector.load %arg3[%c1, %c0_58] : memref<2x32xf32, #tpu.memory_space<vmem>>, vector<1x32xf32>
      %cst_59 = arith.constant dense<0.000000e+00> : vector<16xf32>
      %143 = vector.multi_reduction <add>, %140, %cst_59 [1] : vector<16x32xf32> to vector<16xf32>
      %144 = vector.shape_cast %143 : vector<16xf32> to vector<16x1xf32>
      %cst_60 = arith.constant 3.200000e+01 : f32
      %145 = vector.broadcast %cst_60 : f32 to vector<16x1xf32>
      %146 = arith.divf %144, %145 : vector<16x1xf32>
      %147 = vector.broadcast %146 : vector<16x1xf32> to vector<16x32xf32>
      %148 = arith.subf %140, %147 : vector<16x32xf32>
      %149 = vector.broadcast %146 : vector<16x1xf32> to vector<16x32xf32>
      %150 = arith.subf %140, %149 : vector<16x32xf32>
      %151 = arith.mulf %148, %150 : vector<16x32xf32>
      %cst_61 = arith.constant dense<0.000000e+00> : vector<16xf32>
      %152 = vector.multi_reduction <add>, %151, %cst_61 [1] : vector<16x32xf32> to vector<16xf32>
      %153 = vector.shape_cast %152 : vector<16xf32> to vector<16x1xf32>
      %cst_62 = arith.constant 3.200000e+01 : f32
      %154 = vector.broadcast %cst_62 : f32 to vector<16x1xf32>
      %155 = arith.divf %153, %154 : vector<16x1xf32>
      %156 = vector.broadcast %146 : vector<16x1xf32> to vector<16x32xf32>
      %157 = arith.subf %140, %156 : vector<16x32xf32>
      %cst_63 = arith.constant 9.99999996E-13 : f32
      %158 = vector.broadcast %cst_63 : f32 to vector<16x1xf32>
      %159 = arith.addf %155, %158 : vector<16x1xf32>
      %160 = math.rsqrt %159 : vector<16x1xf32>
      %161 = vector.broadcast %160 : vector<16x1xf32> to vector<16x32xf32>
      %162 = arith.mulf %157, %161 : vector<16x32xf32>
      %163 = vector.broadcast %141 : vector<1x32xf32> to vector<16x32xf32>
      %164 = arith.mulf %162, %163 : vector<16x32xf32>
      %165 = vector.broadcast %142 : vector<1x32xf32> to vector<16x32xf32>
      %166 = arith.addf %164, %165 : vector<16x32xf32>
      %c0_64 = arith.constant 0 : index
      %c0_65 = arith.constant 0 : index
      %167 = vector.load %arg11[%c0_64, %c0_65] : memref<16x32xf32, #tpu.memory_space<vmem>>, vector<16x32xf32>
      tpu.vector_store %arg11[%c0_64, %c0_65], %166 {strides = array<i32>} : memref<16x32xf32, #tpu.memory_space<vmem>>, vector<16x32xf32>,
    } else {
    }
    %c0 = arith.constant 0 : index
    %c0_1 = arith.constant 0 : index
    %3 = vector.load %arg11[%c0, %c0_1] : memref<16x32xf32, #tpu.memory_space<vmem>>, vector<16x32xf32>
    %c0_2 = arith.constant 0 : index
    %c0_3 = arith.constant 0 : index
    %4 = vector.load %arg2[%c0_2, %c0_3] : memref<16x16xf32, #tpu.memory_space<vmem>>, vector<16x16xf32>
    %c0_4 = arith.constant 0 : index
    %c0_5 = arith.constant 0 : index
    %c0_6 = arith.constant 0 : index
    %5 = vector.load %arg10[%c0_4, %c0_5, %c0_6] : memref<1x6x32xf32, #tpu.memory_space<vmem>>, vector<1x6x32xf32>
    %6 = vector.shape_cast %5 : vector<1x6x32xf32> to vector<6x32xf32>
    %7 = vector.extract_strided_slice %6 {offsets = [0, 0], sizes = [1, 32], strides = [1, 1]} : vector<6x32xf32> to vector<1x32xf32>
    %8 = vector.extract_strided_slice %6 {offsets = [1, 0], sizes = [1, 32], strides = [1, 1]} : vector<6x32xf32> to vector<1x32xf32>
    %9 = vector.extract_strided_slice %6 {offsets = [2, 0], sizes = [1, 32], strides = [1, 1]} : vector<6x32xf32> to vector<1x32xf32>
    %10 = vector.extract_strided_slice %6 {offsets = [3, 0], sizes = [1, 32], strides = [1, 1]} : vector<6x32xf32> to vector<1x32xf32>
    %11 = vector.extract_strided_slice %6 {offsets = [4, 0], sizes = [1, 32], strides = [1, 1]} : vector<6x32xf32> to vector<1x32xf32>
    %12 = vector.extract_strided_slice %6 {offsets = [5, 0], sizes = [1, 32], strides = [1, 1]} : vector<6x32xf32> to vector<1x32xf32>
    %c0_7 = arith.constant 0 : index
    %c0_8 = arith.constant 0 : index
    %c0_9 = arith.constant 0 : index
    %13 = vector.load %arg4[%c0_7, %c0_8, %c0_9] : memref<1x32x96xf32, #tpu.memory_space<vmem>>, vector<1x32x96xf32>
    %14 = vector.shape_cast %13 : vector<1x32x96xf32> to vector<32x96xf32>
    %cst = arith.constant dense<0.000000e+00> : vector<16x96xf32>
    %15 = tpu.matmul %3, %14, %cst {dimension_numbers = #tpu.dot_dimension_numbers<[1], [0], [0], [1], [0, 0, 1, 1], [], []>} : vector<16x32xf32>, vector<32x96xf32>, vector<16x96xf32> -> vector<16x96xf32>
    %c0_10 = arith.constant 0 : index
    %c0_11 = arith.constant 0 : index
    %c0_12 = arith.constant 0 : index
    %16 = vector.load %arg5[%c0_10, %c0_11, %c0_12] : memref<1x1x96xf32, #tpu.memory_space<vmem>>, vector<1x1x96xf32>
    %17 = vector.shape_cast %16 : vector<1x1x96xf32> to vector<1x96xf32>
    %18 = vector.broadcast %17 : vector<1x96xf32> to vector<16x96xf32>
    %19 = arith.addf %15, %18 : vector<16x96xf32>
    %20 = vector.extract_strided_slice %19 {offsets = [0, 0], sizes = [16, 16], strides = [1, 1]} : vector<16x96xf32> to vector<16x16xf32>
    %21 = vector.extract_strided_slice %19 {offsets = [0, 32], sizes = [16, 16], strides = [1, 1]} : vector<16x96xf32> to vector<16x16xf32>
    %22 = vector.extract_strided_slice %19 {offsets = [0, 64], sizes = [16, 16], strides = [1, 1]} : vector<16x96xf32> to vector<16x16xf32>
    %23 = tpu.transpose %21, [1, 0] : vector<16x16xf32> -> vector<16x16xf32>
    %cst_13 = arith.constant dense<0.000000e+00> : vector<16x16xf32>
    %24 = tpu.matmul %20, %23, %cst_13 {dimension_numbers = #tpu.dot_dimension_numbers<[1], [0], [0], [1], [0, 0, 1, 1], [], []>} : vector<16x16xf32>, vector<16x16xf32>, vector<16x16xf32> -> vector<16x16xf32>
    %cst_14 = arith.constant 2.500000e-01 : f32
    %25 = vector.broadcast %cst_14 : f32 to vector<16x16xf32>
    %26 = arith.mulf %24, %25 : vector<16x16xf32>
    %27 = arith.addf %26, %4 : vector<16x16xf32>
    %cst_15 = arith.constant dense<0xFF800000> : vector<16xf32>
    %28 = vector.multi_reduction <maximumf>, %27, %cst_15 [1] : vector<16x16xf32> to vector<16xf32>
    %29 = vector.shape_cast %28 : vector<16xf32> to vector<16x1xf32>
    %30 = vector.broadcast %29 : vector<16x1xf32> to vector<16x16xf32>
    %31 = arith.subf %27, %30 : vector<16x16xf32>
    %32 = math.exp %31 : vector<16x16xf32>
    %cst_16 = arith.constant dense<0.000000e+00> : vector<16xf32>
    %33 = vector.multi_reduction <add>, %32, %cst_16 [1] : vector<16x16xf32> to vector<16xf32>
    %34 = vector.shape_cast %33 : vector<16xf32> to vector<16x1xf32>
    %35 = tpu.reciprocal %34 {approx = true} : vector<16x1xf32> -> vector<16x1xf32>
    %36 = vector.broadcast %35 : vector<16x1xf32> to vector<16x16xf32>
    %37 = arith.mulf %32, %36 : vector<16x16xf32>
    %cst_17 = arith.constant dense<0.000000e+00> : vector<16x16xf32>
    %38 = tpu.matmul %37, %22, %cst_17 {dimension_numbers = #tpu.dot_dimension_numbers<[1], [0], [0], [1], [0, 0, 1, 1], [], []>} : vector<16x16xf32>, vector<16x16xf32>, vector<16x16xf32> -> vector<16x16xf32>
    %39 = vector.extract_strided_slice %19 {offsets = [0, 16], sizes = [16, 16], strides = [1, 1]} : vector<16x96xf32> to vector<16x16xf32>
    %40 = vector.extract_strided_slice %19 {offsets = [0, 48], sizes = [16, 16], strides = [1, 1]} : vector<16x96xf32> to vector<16x16xf32>
    %41 = vector.extract_strided_slice %19 {offsets = [0, 80], sizes = [16, 16], strides = [1, 1]} : vector<16x96xf32> to vector<16x16xf32>
    %42 = tpu.transpose %40, [1, 0] : vector<16x16xf32> -> vector<16x16xf32>
    %cst_18 = arith.constant dense<0.000000e+00> : vector<16x16xf32>
    %43 = tpu.matmul %39, %42, %cst_18 {dimension_numbers = #tpu.dot_dimension_numbers<[1], [0], [0], [1], [0, 0, 1, 1], [], []>} : vector<16x16xf32>, vector<16x16xf32>, vector<16x16xf32> -> vector<16x16xf32>
    %cst_19 = arith.constant 2.500000e-01 : f32
    %44 = vector.broadcast %cst_19 : f32 to vector<16x16xf32>
    %45 = arith.mulf %43, %44 : vector<16x16xf32>
    %46 = arith.addf %45, %4 : vector<16x16xf32>
    %cst_20 = arith.constant dense<0xFF800000> : vector<16xf32>
    %47 = vector.multi_reduction <maximumf>, %46, %cst_20 [1] : vector<16x16xf32> to vector<16xf32>
    %48 = vector.shape_cast %47 : vector<16xf32> to vector<16x1xf32>
    %49 = vector.broadcast %48 : vector<16x1xf32> to vector<16x16xf32>
    %50 = arith.subf %46, %49 : vector<16x16xf32>
    %51 = math.exp %50 : vector<16x16xf32>
    %cst_21 = arith.constant dense<0.000000e+00> : vector<16xf32>
    %52 = vector.multi_reduction <add>, %51, %cst_21 [1] : vector<16x16xf32> to vector<16xf32>
    %53 = vector.shape_cast %52 : vector<16xf32> to vector<16x1xf32>
    %54 = tpu.reciprocal %53 {approx = true} : vector<16x1xf32> -> vector<16x1xf32>
    %55 = vector.broadcast %54 : vector<16x1xf32> to vector<16x16xf32>
    %56 = arith.mulf %51, %55 : vector<16x16xf32>
    %cst_22 = arith.constant dense<0.000000e+00> : vector<16x16xf32>
    %57 = tpu.matmul %56, %41, %cst_22 {dimension_numbers = #tpu.dot_dimension_numbers<[1], [0], [0], [1], [0, 0, 1, 1], [], []>} : vector<16x16xf32>, vector<16x16xf32>, vector<16x16xf32> -> vector<16x16xf32>
    %58 = tpu.concatenate %38, %57 in 1 : vector<16x16xf32>, vector<16x16xf32> -> vector<16x32xf32>
    %c0_23 = arith.constant 0 : index
    %c0_24 = arith.constant 0 : index
    %c0_25 = arith.constant 0 : index
    %59 = vector.load %arg6[%c0_23, %c0_24, %c0_25] : memref<1x32x32xf32, #tpu.memory_space<vmem>>, vector<1x32x32xf32>
    %60 = vector.shape_cast %59 : vector<1x32x32xf32> to vector<32x32xf32>
    %cst_26 = arith.constant dense<0.000000e+00> : vector<16x32xf32>
    %61 = tpu.matmul %58, %60, %cst_26 {dimension_numbers = #tpu.dot_dimension_numbers<[1], [0], [0], [1], [0, 0, 1, 1], [], []>} : vector<16x32xf32>, vector<32x32xf32>, vector<16x32xf32> -> vector<16x32xf32>
    %62 = vector.broadcast %7 : vector<1x32xf32> to vector<16x32xf32>
    %63 = arith.addf %61, %62 : vector<16x32xf32>
    %64 = arith.addf %3, %63 : vector<16x32xf32>
    %cst_27 = arith.constant dense<0.000000e+00> : vector<16xf32>
    %65 = vector.multi_reduction <add>, %64, %cst_27 [1] : vector<16x32xf32> to vector<16xf32>
    %66 = vector.shape_cast %65 : vector<16xf32> to vector<16x1xf32>
    %cst_28 = arith.constant 3.200000e+01 : f32
    %67 = vector.broadcast %cst_28 : f32 to vector<16x1xf32>
    %68 = arith.divf %66, %67 : vector<16x1xf32>
    %69 = vector.broadcast %68 : vector<16x1xf32> to vector<16x32xf32>
    %70 = arith.subf %64, %69 : vector<16x32xf32>
    %71 = vector.broadcast %68 : vector<16x1xf32> to vector<16x32xf32>
    %72 = arith.subf %64, %71 : vector<16x32xf32>
    %73 = arith.mulf %70, %72 : vector<16x32xf32>
    %cst_29 = arith.constant dense<0.000000e+00> : vector<16xf32>
    %74 = vector.multi_reduction <add>, %73, %cst_29 [1] : vector<16x32xf32> to vector<16xf32>
    %75 = vector.shape_cast %74 : vector<16xf32> to vector<16x1xf32>
    %cst_30 = arith.constant 3.200000e+01 : f32
    %76 = vector.broadcast %cst_30 : f32 to vector<16x1xf32>
    %77 = arith.divf %75, %76 : vector<16x1xf32>
    %78 = vector.broadcast %68 : vector<16x1xf32> to vector<16x32xf32>
    %79 = arith.subf %64, %78 : vector<16x32xf32>
    %cst_31 = arith.constant 9.99999996E-13 : f32
    %80 = vector.broadcast %cst_31 : f32 to vector<16x1xf32>
    %81 = arith.addf %77, %80 : vector<16x1xf32>
    %82 = math.rsqrt %81 : vector<16x1xf32>
    %83 = vector.broadcast %82 : vector<16x1xf32> to vector<16x32xf32>
    %84 = arith.mulf %79, %83 : vector<16x32xf32>
    %85 = vector.broadcast %8 : vector<1x32xf32> to vector<16x32xf32>
    %86 = arith.mulf %84, %85 : vector<16x32xf32>
    %87 = vector.broadcast %9 : vector<1x32xf32> to vector<16x32xf32>
    %88 = arith.addf %86, %87 : vector<16x32xf32>
    %c0_32 = arith.constant 0 : index
    %c0_33 = arith.constant 0 : index
    %c0_34 = arith.constant 0 : index
    %89 = vector.load %arg7[%c0_32, %c0_33, %c0_34] : memref<1x32x64xf32, #tpu.memory_space<vmem>>, vector<1x32x64xf32>
    %90 = vector.shape_cast %89 : vector<1x32x64xf32> to vector<32x64xf32>
    %cst_35 = arith.constant dense<0.000000e+00> : vector<16x64xf32>
    %91 = tpu.matmul %88, %90, %cst_35 {dimension_numbers = #tpu.dot_dimension_numbers<[1], [0], [0], [1], [0, 0, 1, 1], [], []>} : vector<16x32xf32>, vector<32x64xf32>, vector<16x64xf32> -> vector<16x64xf32>
    %c0_36 = arith.constant 0 : index
    %c0_37 = arith.constant 0 : index
    %c0_38 = arith.constant 0 : index
    %92 = vector.load %arg8[%c0_36, %c0_37, %c0_38] : memref<1x1x64xf32, #tpu.memory_space<vmem>>, vector<1x1x64xf32>
    %93 = vector.shape_cast %92 : vector<1x1x64xf32> to vector<1x64xf32>
    %94 = vector.broadcast %93 : vector<1x64xf32> to vector<16x64xf32>
    %95 = arith.addf %91, %94 : vector<16x64xf32>
    %cst_39 = arith.constant 5.000000e-01 : f32
    %96 = vector.broadcast %cst_39 : f32 to vector<16x64xf32>
    %97 = arith.mulf %96, %95 : vector<16x64xf32>
    %cst_40 = arith.constant 4.471500e-02 : f32
    %98 = vector.broadcast %cst_40 : f32 to vector<16x64xf32>
    %99 = arith.mulf %98, %95 : vector<16x64xf32>
    %100 = arith.mulf %99, %95 : vector<16x64xf32>
    %101 = arith.mulf %100, %95 : vector<16x64xf32>
    %102 = arith.addf %95, %101 : vector<16x64xf32>
    %cst_41 = arith.constant 0.797884583 : f32
    %103 = vector.broadcast %cst_41 : f32 to vector<16x64xf32>
    %104 = arith.mulf %103, %102 : vector<16x64xf32>
    %105 = math.tanh %104 : vector<16x64xf32>
    %cst_42 = arith.constant 1.000000e+00 : f32
    %106 = vector.broadcast %cst_42 : f32 to vector<16x64xf32>
    %107 = arith.addf %106, %105 : vector<16x64xf32>
    %108 = arith.mulf %97, %107 : vector<16x64xf32>
    %c0_43 = arith.constant 0 : index
    %c0_44 = arith.constant 0 : index
    %c0_45 = arith.constant 0 : index
    %109 = vector.load %arg9[%c0_43, %c0_44, %c0_45] : memref<1x64x32xf32, #tpu.memory_space<vmem>>, vector<1x64x32xf32>
    %110 = vector.shape_cast %109 : vector<1x64x32xf32> to vector<64x32xf32>
    %cst_46 = arith.constant dense<0.000000e+00> : vector<16x32xf32>
    %111 = tpu.matmul %108, %110, %cst_46 {dimension_numbers = #tpu.dot_dimension_numbers<[1], [0], [0], [1], [0, 0, 1, 1], [], []>} : vector<16x64xf32>, vector<64x32xf32>, vector<16x32xf32> -> vector<16x32xf32>
    %112 = vector.broadcast %10 : vector<1x32xf32> to vector<16x32xf32>
    %113 = arith.addf %111, %112 : vector<16x32xf32>
    %114 = arith.addf %88, %113 : vector<16x32xf32>
    %cst_47 = arith.constant dense<0.000000e+00> : vector<16xf32>
    %115 = vector.multi_reduction <add>, %114, %cst_47 [1] : vector<16x32xf32> to vector<16xf32>
    %116 = vector.shape_cast %115 : vector<16xf32> to vector<16x1xf32>
    %cst_48 = arith.constant 3.200000e+01 : f32
    %117 = vector.broadcast %cst_48 : f32 to vector<16x1xf32>
    %118 = arith.divf %116, %117 : vector<16x1xf32>
    %119 = vector.broadcast %118 : vector<16x1xf32> to vector<16x32xf32>
    %120 = arith.subf %114, %119 : vector<16x32xf32>
    %121 = vector.broadcast %118 : vector<16x1xf32> to vector<16x32xf32>
    %122 = arith.subf %114, %121 : vector<16x32xf32>
    %123 = arith.mulf %120, %122 : vector<16x32xf32>
    %cst_49 = arith.constant dense<0.000000e+00> : vector<16xf32>
    %124 = vector.multi_reduction <add>, %123, %cst_49 [1] : vector<16x32xf32> to vector<16xf32>
    %125 = vector.shape_cast %124 : vector<16xf32> to vector<16x1xf32>
    %cst_50 = arith.constant 3.200000e+01 : f32
    %126 = vector.broadcast %cst_50 : f32 to vector<16x1xf32>
    %127 = arith.divf %125, %126 : vector<16x1xf32>
    %128 = vector.broadcast %118 : vector<16x1xf32> to vector<16x32xf32>
    %129 = arith.subf %114, %128 : vector<16x32xf32>
    %cst_51 = arith.constant 9.99999996E-13 : f32
    %130 = vector.broadcast %cst_51 : f32 to vector<16x1xf32>
    %131 = arith.addf %127, %130 : vector<16x1xf32>
    %132 = math.rsqrt %131 : vector<16x1xf32>
    %133 = vector.broadcast %132 : vector<16x1xf32> to vector<16x32xf32>
    %134 = arith.mulf %129, %133 : vector<16x32xf32>
    %135 = vector.broadcast %11 : vector<1x32xf32> to vector<16x32xf32>
    %136 = arith.mulf %134, %135 : vector<16x32xf32>
    %137 = vector.broadcast %12 : vector<1x32xf32> to vector<16x32xf32>
    %138 = arith.addf %136, %137 : vector<16x32xf32>
    %c0_52 = arith.constant 0 : index
    %c0_53 = arith.constant 0 : index
    %139 = vector.load %arg11[%c0_52, %c0_53] : memref<16x32xf32, #tpu.memory_space<vmem>>, vector<16x32xf32>
    tpu.vector_store %arg11[%c0_52, %c0_53], %138 {strides = array<i32>} : memref<16x32xf32, #tpu.memory_space<vmem>>, vector<16x32xf32>,
    return
  }
  func.func @transform_0(%arg0: i32) -> (i32, i32) {
    %c0_i32 = arith.constant 0 : i32
    %c0_i32_0 = arith.constant 0 : i32
    %c0_i32_1 = arith.constant 0 : i32
    return %c0_i32, %c0_i32_0 : i32, i32
  }
  func.func @transform_1(%arg0: i32) -> (i32, i32) {
    %c0_i32 = arith.constant 0 : i32
    %c0_i32_0 = arith.constant 0 : i32
    %c0_i32_1 = arith.constant 0 : i32
    return %c0_i32, %c0_i32_0 : i32, i32
  }
  func.func @transform_2(%arg0: i32) -> (i32, i32) {
    %c0_i32 = arith.constant 0 : i32
    %c0_i32_0 = arith.constant 0 : i32
    %c0_i32_1 = arith.constant 0 : i32
    return %c0_i32, %c0_i32_0 : i32, i32
  }
  func.func @transform_3(%arg0: i32) -> (i32, i32, i32) {
    %c0_i32 = arith.constant 0 : i32
    %c0_i32_0 = arith.constant 0 : i32
    %c0_i32_1 = arith.constant 0 : i32
    return %arg0, %c0_i32, %c0_i32_0 : i32, i32, i32
  }
  func.func @transform_4(%arg0: i32) -> (i32, i32, i32) {
    %c0_i32 = arith.constant 0 : i32
    %c0_i32_0 = arith.constant 0 : i32
    %c0_i32_1 = arith.constant 0 : i32
    return %arg0, %c0_i32, %c0_i32_0 : i32, i32, i32
  }
  func.func @transform_5(%arg0: i32) -> (i32, i32, i32) {
    %c0_i32 = arith.constant 0 : i32
    %c0_i32_0 = arith.constant 0 : i32
    %c0_i32_1 = arith.constant 0 : i32
    return %arg0, %c0_i32, %c0_i32_0 : i32, i32, i32
  }
  func.func @transform_6(%arg0: i32) -> (i32, i32, i32) {
    %c0_i32 = arith.constant 0 : i32
    %c0_i32_0 = arith.constant 0 : i32
    %c0_i32_1 = arith.constant 0 : i32
    return %arg0, %c0_i32, %c0_i32_0 : i32, i32, i32
  }
  func.func @transform_7(%arg0: i32) -> (i32, i32, i32) {
    %c0_i32 = arith.constant 0 : i32
    %c0_i32_0 = arith.constant 0 : i32
    %c0_i32_1 = arith.constant 0 : i32
    return %arg0, %c0_i32, %c0_i32_0 : i32, i32, i32
  }
  func.func @transform_8(%arg0: i32) -> (i32, i32, i32) {
    %c0_i32 = arith.constant 0 : i32
    %c0_i32_0 = arith.constant 0 : i32
    %c0_i32_1 = arith.constant 0 : i32
    return %arg0, %c0_i32, %c0_i32_0 : i32, i32, i32
  }
  func.func @transform_9(%arg0: i32) -> (i32, i32, i32) {
    %c0_i32 = arith.constant 0 : i32
    %c0_i32_0 = arith.constant 0 : i32
    %c0_i32_1 = arith.constant 0 : i32
    return %arg0, %c0_i32, %c0_i32_0 : i32, i32, i32
  }
  func.func @transform_10(%arg0: i32) -> (i32, i32) {
    %c0_i32 = arith.constant 0 : i32
    %c0_i32_0 = arith.constant 0 : i32
    %c0_i32_1 = arith.constant 0 : i32
    return %c0_i32, %c0_i32_0 : i32, i32
  }
}

</mosaic_0001>

<llo_original>
// kernel: tpu_custom_call.1
$region0: #{tpu_custom_call.1}
  #allocation0 [shape = 'u32[]', space=smem, size = 0x4, offset = 0x4, fixed_abs, tag = 'smem constant byte address 0x4 - core index']
  #allocation1 [shape = 'u32[144,128]{1,0:T(1,128)}', space=vmem, size = 0x12000, scoped, tag = 'internal scratch']
  %s0 = inlined_call_operand.vmem [shape: f32[16,32], index: 0, kind: input, shape index: {}]
  %s1 = inlined_call_operand.hbm [shape: f32[16,16], index: 1, kind: input, shape index: {}]
  %s2 = inlined_call_operand.vmem [shape: f32[2,32], index: 2, kind: input, shape index: {}]
  %s3 = inlined_call_operand.vmem [shape: f32[2,32,96], index: 3, kind: input, shape index: {}]
  %s4 = inlined_call_operand.vmem [shape: f32[2,1,96], index: 4, kind: input, shape index: {}]
  %s5 = inlined_call_operand.vmem [shape: f32[2,32,32], index: 5, kind: input, shape index: {}]
  %s6 = inlined_call_operand.vmem [shape: f32[2,32,64], index: 6, kind: input, shape index: {}]
  %s7 = inlined_call_operand.vmem [shape: f32[2,1,64], index: 7, kind: input, shape index: {}]
  %s8 = inlined_call_operand.vmem [shape: f32[2,64,32], index: 8, kind: input, shape index: {}]
  %s9 = inlined_call_operand.vmem [shape: f32[2,6,32], index: 9, kind: input, shape index: {}]
  %s10 = inlined_call_operand.hbm [shape: f32[16,32], index: 10, kind: output, shape index: {}]
  %s11 = sld [smem:[#allocation0]]
  $region81: #{tpu_custom_call.1} parent=0
    _
  %s13 = ssub.s32 1, %s11
  %s14 = scalar_select 0, %s13, %s11
  $region1: #{tpu_custom_call.1} parent=0
    #allocation2 [shape = 'u8[8192]{0}', space=vmem, size = 0x2000, scoped, tag = 'input window, operand 1, single buffered']
    #allocation3 [shape = 's32[2]{0}', space=sflag, size = 0x8, scoped, tag = 'scoped memory for tpu_custom_call.1']
    #allocation4 [shape = 's32[2]{0}', space=sflag, size = 0x8, scoped, tag = 'scoped memory for tpu_custom_call.1']
    #allocation5 [shape = 'u8[8192]{0}', space=vmem, size = 0x2000, scoped, tag = 'output window, operand 0, single buffered']
    %15 = vsyncpa [#allocation3], 0
    %16 = vsyncpa [#allocation4], 0
    loop: start=0, step=1, limit=4
    $region2: #{tpu_custom_call.1} parent=1 // loop_pre_header
      _
    $region3: #{tpu_custom_call.1} parent=1 // loop_header
      %s18 = sphi 0, %s22
      %p19 = scmp.ge.s32.totalorder %s18, 4
      %s26 = sphi 0, %s26
      %s28 = sphi 0, %s26
      %s29 = sphi 0, %s28
      %s43 = sphi 0, %s29
      %s47 = sphi 0, %s47
      %s49 = sphi 0, %s47
      %s50 = sphi 0, %s49
      %s64 = sphi 0, %s50
      %s68 = sphi 0, %s68
      %s70 = sphi 0, %s68
      %s71 = sphi 0, %s70
      %s85 = sphi 0, %s71
      %s91 = sphi 0, %s93
      %s94 = sphi 0, %s91
      %s95 = sphi 0, %s94
      %s111 = sphi 0, %s95
      %s117 = sphi 0, %s119
      %s120 = sphi 0, %s117
      %s121 = sphi 0, %s120
      %s137 = sphi 0, %s121
      %s143 = sphi 0, %s145
      %s146 = sphi 0, %s143
      %s147 = sphi 0, %s146
      %s163 = sphi 0, %s147
      %s169 = sphi 0, %s171
      %s172 = sphi 0, %s169
      %s173 = sphi 0, %s172
      %s189 = sphi 0, %s173
      %s195 = sphi 0, %s197
      %s198 = sphi 0, %s195
      %s199 = sphi 0, %s198
      %s215 = sphi 0, %s199
      %s221 = sphi 0, %s223
      %s224 = sphi 0, %s221
      %s225 = sphi 0, %s224
      %s241 = sphi 0, %s225
      %s247 = sphi 0, %s249
      %s250 = sphi 0, %s247
      %s251 = sphi 0, %s250
      %s267 = sphi 0, %s251
      %s271 = sphi 0, %s271
      %s273 = sphi 0, %s271
      %s274 = sphi 0, %s273
      %s288 = sphi 0, %s274
    $region4: #{tpu_custom_call.1} parent=1 // loop_header_branch
      %21 = sbr.rel (%p19) target = $region8
    $region5: #{tpu_custom_call.1} parent=1 // loop_body
      %s23 = ssub.s32 %s18, 1
      %s24 = ssub.s32 %s18, 2
      %s25 = sadd.s32 %s18, 1
      %s27 = sadd.s32 %s26, 1
      %p30 = scmp.eq.s32.totalorder %s18, 1
      %p31 = scmp.ne.s32.totalorder %s26, %s28
      %p32 = scmp.eq.s32.totalorder %s18, 0
      %p33 = por %p31, %p32
      %p34 = scmp.ne.s32.totalorder %s26, %s28
      %p35 = scmp.eq.s32.totalorder %s23, 1
      %p36 = por %p34, %p35
      %p37 = scmp.ne.s32.totalorder %s28, %s29
      %p38 = scmp.eq.s32.totalorder %s23, 0
      %p39 = por %p37, %p38
      %p40 = scmp.ne.s32.totalorder %s28, %s29
      %p41 = scmp.eq.s32.totalorder %s24, 1
      %p42 = por %p40, %p41
      %p44 = scmp.ne.s32.totalorder %s29, %s43
      %p45 = scmp.eq.s32.totalorder %s24, 0
      %p46 = por %p44, %p45
      %s48 = sadd.s32 %s47, 1
      %p51 = scmp.eq.s32.totalorder %s18, 1
      %p52 = scmp.ne.s32.totalorder %s47, %s49
      %p53 = scmp.eq.s32.totalorder %s18, 0
      %p54 = por %p52, %p53
      %p55 = scmp.ne.s32.totalorder %s47, %s49
      %p56 = scmp.eq.s32.totalorder %s23, 1
      %p57 = por %p55, %p56
      %p58 = scmp.ne.s32.totalorder %s49, %s50
      %p59 = scmp.eq.s32.totalorder %s23, 0
      %p60 = por %p58, %p59
      %p61 = scmp.ne.s32.totalorder %s49, %s50
      %p62 = scmp.eq.s32.totalorder %s24, 1
      %p63 = por %p61, %p62
      %p65 = scmp.ne.s32.totalorder %s50, %s64
      %p66 = scmp.eq.s32.totalorder %s24, 0
      %p67 = por %p65, %p66
      %s69 = sadd.s32 %s68, 1
      %p72 = scmp.eq.s32.totalorder %s18, 1
      %p73 = scmp.ne.s32.totalorder %s68, %s70
      %p74 = scmp.eq.s32.totalorder %s18, 0
      %p75 = por %p73, %p74
      %p76 = scmp.ne.s32.totalorder %s68, %s70
      %p77 = scmp.eq.s32.totalorder %s23, 1
      %p78 = por %p76, %p77
      %p79 = scmp.ne.s32.totalorder %s70, %s71
      %p80 = scmp.eq.s32.totalorder %s23, 0
      %p81 = por %p79, %p80
      %p82 = scmp.ne.s32.totalorder %s70, %s71
      %p83 = scmp.eq.s32.totalorder %s24, 1
      %p84 = por %p82, %p83
      %p86 = scmp.ne.s32.totalorder %s71, %s85
      %p87 = scmp.eq.s32.totalorder %s24, 0
      %p88 = por %p86, %p87
      %s89 = ssub.s32 %s18, %s25
      %p90 = scmp.eq.s32.totalorder %s89, 0
      %s92 = sadd.s32 %s91, 1
      %s93 = scalar_select %p90, %s91, %s92
      %p96 = pneg %p90
      %p97 = scmp.eq.s32.totalorder %s18, 1
      %p98 = por %p96, %p97
      %p99 = scmp.ne.s32.totalorder %s91, %s94
      %p100 = scmp.eq.s32.totalorder %s18, 0
      %p101 = por %p99, %p100
      %p102 = scmp.ne.s32.totalorder %s91, %s94
      %p103 = scmp.eq.s32.totalorder %s23, 1
      %p104 = por %p102, %p103
      %p105 = scmp.ne.s32.totalorder %s94, %s95
      %p106 = scmp.eq.s32.totalorder %s23, 0
      %p107 = por %p105, %p106
      %p108 = scmp.ne.s32.totalorder %s94, %s95
      %p109 = scmp.eq.s32.totalorder %s24, 1
      %p110 = por %p108, %p109
      %p112 = scmp.ne.s32.totalorder %s95, %s111
      %p113 = scmp.eq.s32.totalorder %s24, 0
      %p114 = por %p112, %p113
      %s115 = ssub.s32 %s18, %s25
      %p116 = scmp.eq.s32.totalorder %s115, 0
      %s118 = sadd.s32 %s117, 1
      %s119 = scalar_select %p116, %s117, %s118
      %p122 = pneg %p116
      %p123 = scmp.eq.s32.totalorder %s18, 1
      %p124 = por %p122, %p123
      %p125 = scmp.ne.s32.totalorder %s117, %s120
      %p126 = scmp.eq.s32.totalorder %s18, 0
      %p127 = por %p125, %p126
      %p128 = scmp.ne.s32.totalorder %s117, %s120
      %p129 = scmp.eq.s32.totalorder %s23, 1
      %p130 = por %p128, %p129
      %p131 = scmp.ne.s32.totalorder %s120, %s121
      %p132 = scmp.eq.s32.totalorder %s23, 0
      %p133 = por %p131, %p132
      %p134 = scmp.ne.s32.totalorder %s120, %s121
      %p135 = scmp.eq.s32.totalorder %s24, 1
      %p136 = por %p134, %p135
      %p138 = scmp.ne.s32.totalorder %s121, %s137
      %p139 = scmp.eq.s32.totalorder %s24, 0
      %p140 = por %p138, %p139
      %s141 = ssub.s32 %s18, %s25
      %p142 = scmp.eq.s32.totalorder %s141, 0
      %s144 = sadd.s32 %s143, 1
      %s145 = scalar_select %p142, %s143, %s144
      %p148 = pneg %p142
      %p149 = scmp.eq.s32.totalorder %s18, 1
      %p150 = por %p148, %p149
      %p151 = scmp.ne.s32.totalorder %s143, %s146
      %p152 = scmp.eq.s32.totalorder %s18, 0
      %p153 = por %p151, %p152
      %p154 = scmp.ne.s32.totalorder %s143, %s146
      %p155 = scmp.eq.s32.totalorder %s23, 1
      %p156 = por %p154, %p155
      %p157 = scmp.ne.s32.totalorder %s146, %s147
      %p158 = scmp.eq.s32.totalorder %s23, 0
      %p159 = por %p157, %p158
      %p160 = scmp.ne.s32.totalorder %s146, %s147
      %p161 = scmp.eq.s32.totalorder %s24, 1
      %p162 = por %p160, %p161
      %p164 = scmp.ne.s32.totalorder %s147, %s163
      %p165 = scmp.eq.s32.totalorder %s24, 0
      %p166 = por %p164, %p165
      %s167 = ssub.s32 %s18, %s25
      %p168 = scmp.eq.s32.totalorder %s167, 0
      %s170 = sadd.s32 %s169, 1
      %s171 = scalar_select %p168, %s169, %s170
      %p174 = pneg %p168
      %p175 = scmp.eq.s32.totalorder %s18, 1
      %p176 = por %p174, %p175
      %p177 = scmp.ne.s32.totalorder %s169, %s172
      %p178 = scmp.eq.s32.totalorder %s18, 0
      %p179 = por %p177, %p178
      %p180 = scmp.ne.s32.totalorder %s169, %s172
      %p181 = scmp.eq.s32.totalorder %s23, 1
      %p182 = por %p180, %p181
      %p183 = scmp.ne.s32.totalorder %s172, %s173
      %p184 = scmp.eq.s32.totalorder %s23, 0
      %p185 = por %p183, %p184
      %p186 = scmp.ne.s32.totalorder %s172, %s173
      %p187 = scmp.eq.s32.totalorder %s24, 1
      %p188 = por %p186, %p187
      %p190 = scmp.ne.s32.totalorder %s173, %s189
      %p191 = scmp.eq.s32.totalorder %s24, 0
      %p192 = por %p190, %p191
      %s193 = ssub.s32 %s18, %s25
      %p194 = scmp.eq.s32.totalorder %s193, 0
      %s196 = sadd.s32 %s195, 1
      %s197 = scalar_select %p194, %s195, %s196
      %p200 = pneg %p194
      %p201 = scmp.eq.s32.totalorder %s18, 1
      %p202 = por %p200, %p201
      %p203 = scmp.ne.s32.totalorder %s195, %s198
      %p204 = scmp.eq.s32.totalorder %s18, 0
      %p205 = por %p203, %p204
      %p206 = scmp.ne.s32.totalorder %s195, %s198
      %p207 = scmp.eq.s32.totalorder %s23, 1
      %p208 = por %p206, %p207
      %p209 = scmp.ne.s32.totalorder %s198, %s199
      %p210 = scmp.eq.s32.totalorder %s23, 0
      %p211 = por %p209, %p210
      %p212 = scmp.ne.s32.totalorder %s198, %s199
      %p213 = scmp.eq.s32.totalorder %s24, 1
      %p214 = por %p212, %p213
      %p216 = scmp.ne.s32.totalorder %s199, %s215
      %p217 = scmp.eq.s32.totalorder %s24, 0
      %p218 = por %p216, %p217
      %s219 = ssub.s32 %s18, %s25
      %p220 = scmp.eq.s32.totalorder %s219, 0
      %s222 = sadd.s32 %s221, 1
      %s223 = scalar_select %p220, %s221, %s222
      %p226 = pneg %p220
      %p227 = scmp.eq.s32.totalorder %s18, 1
      %p228 = por %p226, %p227
      %p229 = scmp.ne.s32.totalorder %s221, %s224
      %p230 = scmp.eq.s32.totalorder %s18, 0
      %p231 = por %p229, %p230
      %p232 = scmp.ne.s32.totalorder %s221, %s224
      %p233 = scmp.eq.s32.totalorder %s23, 1
      %p234 = por %p232, %p233
      %p235 = scmp.ne.s32.totalorder %s224, %s225
      %p236 = scmp.eq.s32.totalorder %s23, 0
      %p237 = por %p235, %p236
      %p238 = scmp.ne.s32.totalorder %s224, %s225
      %p239 = scmp.eq.s32.totalorder %s24, 1
      %p240 = por %p238, %p239
      %p242 = scmp.ne.s32.totalorder %s225, %s241
      %p243 = scmp.eq.s32.totalorder %s24, 0
      %p244 = por %p242, %p243
      %s245 = ssub.s32 %s18, %s25
      %p246 = scmp.eq.s32.totalorder %s245, 0
      %s248 = sadd.s32 %s247, 1
      %s249 = scalar_select %p246, %s247, %s248
      %p252 = pneg %p246
      %p253 = scmp.eq.s32.totalorder %s18, 1
      %p254 = por %p252, %p253
      %p255 = scmp.ne.s32.totalorder %s247, %s250
      %p256 = scmp.eq.s32.totalorder %s18, 0
      %p257 = por %p255, %p256
      %p258 = scmp.ne.s32.totalorder %s247, %s250
      %p259 = scmp.eq.s32.totalorder %s23, 1
      %p260 = por %p258, %p259
      %p261 = scmp.ne.s32.totalorder %s250, %s251
      %p262 = scmp.eq.s32.totalorder %s23, 0
      %p263 = por %p261, %p262
      %p264 = scmp.ne.s32.totalorder %s250, %s251
      %p265 = scmp.eq.s32.totalorder %s24, 1
      %p266 = por %p264, %p265
      %p268 = scmp.ne.s32.totalorder %s251, %s267
      %p269 = scmp.eq.s32.totalorder %s24, 0
      %p270 = por %p268, %p269
      %s272 = sadd.s32 %s271, 1
      %p275 = scmp.eq.s32.totalorder %s18, 1
      %p276 = scmp.ne.s32.totalorder %s271, %s273
      %p277 = scmp.eq.s32.totalorder %s18, 0
      %p278 = por %p276, %p277
      %p279 = scmp.ne.s32.totalorder %s271, %s273
      %p280 = scmp.eq.s32.totalorder %s23, 1
      %p281 = por %p279, %p280
      %p282 = scmp.ne.s32.totalorder %s273, %s274
      %p283 = scmp.eq.s32.totalorder %s23, 0
      %p284 = por %p282, %p283
      %p285 = scmp.ne.s32.totalorder %s273, %s274
      %p286 = scmp.eq.s32.totalorder %s24, 1
      %p287 = por %p285, %p286
      %p289 = scmp.ne.s32.totalorder %s274, %s288
      %p290 = scmp.eq.s32.totalorder %s24, 0
      %p291 = por %p289, %p290
      %p292 = scmp.le.s32.totalorder 1, %s18
      %p293 = scmp.lt.s32.totalorder %s18, 3
      %p294 = pnand %p292, %p293
      %p295 = pneg %p294
      // Predicated region
      $region9: #{tpu_custom_call.1} parent=5 // pred_check
        _
      $region10: #{tpu_custom_call.1} parent=5 // pred_check_branch
        %297 = sbr.rel (%p294) target = $region12
      $region11: #{tpu_custom_call.1} parent=5 // pred_region
        %s298 = ssub.s32 %s18, 1
        // Predicated region
        $region13: #{tpu_custom_call.1} parent=11 // pred_check
          %p299 = pneg %p39
        $region14: #{tpu_custom_call.1} parent=11 // pred_check_branch
          %301 = sbr.rel (%p299) target = $region16
        $region15: #{tpu_custom_call.1} parent=11 // pred_region
          _
        $region16: #{tpu_custom_call.1} parent=11 // pred_fallthru
          _
        // Predicated region
        $region17: #{tpu_custom_call.1} parent=11 // pred_check
          %p302 = pneg %p60
        $region18: #{tpu_custom_call.1} parent=11 // pred_check_branch
          %304 = sbr.rel (%p302) target = $region20
        $region19: #{tpu_custom_call.1} parent=11 // pred_region
          %s306 = ssub.s32 256, 256
          %307 = vsyncadd [#allocation3], %s306
          %s308 = sshll.u32 [#allocation2], 4
          %s309 = int_to_ptr.vmem [resolvable:$true] %s308
          %314 = dma.hbm_to_vmem [thread:$0]  %s1, 256, %s309, [#allocation3], 128, 128, 8
        $region20: #{tpu_custom_call.1} parent=11 // pred_fallthru
          _
        // Predicated region
        $region21: #{tpu_custom_call.1} parent=11 // pred_check
          %p315 = pneg %p81
        $region22: #{tpu_custom_call.1} parent=11 // pred_check_branch
          %317 = sbr.rel (%p315) target = $region24
        $region23: #{tpu_custom_call.1} parent=11 // pred_region
          _
        $region24: #{tpu_custom_call.1} parent=11 // pred_fallthru
          _
      $region12: #{tpu_custom_call.1} parent=5 // pred_fallthru
        _
      %p318 = scmp.lt.s32.totalorder %s18, 2
      // Predicated region
      $region25: #{tpu_custom_call.1} parent=5 // pred_check
        %p319 = pneg %p318
      $region26: #{tpu_custom_call.1} parent=5 // pred_check_branch
        %321 = sbr.rel (%p319) target = $region28
      $region27: #{tpu_custom_call.1} parent=5 // pred_region
        // Predicated region
        $region29: #{tpu_custom_call.1} parent=27 // pred_check
          %p322 = pneg %p101
        $region30: #{tpu_custom_call.1} parent=27 // pred_check_branch
          %324 = sbr.rel (%p322) target = $region32
        $region31: #{tpu_custom_call.1} parent=27 // pred_region
          %p325 = scmp.lt.s32.totalorder %s18, 1
          %s326 = scalar_select %p325, %s18, 1
          %s327 = smul.addr %s326, 4
          %s328 = smul.addr %s327, 8
          %s329 = scalar_lea.vmem %s3, %s328
        $region32: #{tpu_custom_call.1} parent=27 // pred_fallthru
          _
        // Predicated region
        $region33: #{tpu_custom_call.1} parent=27 // pred_check
          %p330 = pneg %p127
        $region34: #{tpu_custom_call.1} parent=27 // pred_check_branch
          %332 = sbr.rel (%p330) target = $region36
        $region35: #{tpu_custom_call.1} parent=27 // pred_region
          %p333 = scmp.lt.s32.totalorder %s18, 1
          %s334 = scalar_select %p333, %s18, 1
          %s335 = scalar_lea.vmem %s4, %s334
        $region36: #{tpu_custom_call.1} parent=27 // pred_fallthru
          _
        // Predicated region
        $region37: #{tpu_custom_call.1} parent=27 // pred_check
          %p336 = pneg %p153
        $region38: #{tpu_custom_call.1} parent=27 // pred_check_branch
          %338 = sbr.rel (%p336) target = $region40
        $region39: #{tpu_custom_call.1} parent=27 // pred_region
          %p339 = scmp.lt.s32.totalorder %s18, 1
          %s340 = scalar_select %p339, %s18, 1
          %s341 = smul.addr %s340, 4
          %s342 = smul.addr %s341, 8
          %s343 = scalar_lea.vmem %s5, %s342
        $region40: #{tpu_custom_call.1} parent=27 // pred_fallthru
          _
        // Predicated region
        $region41: #{tpu_custom_call.1} parent=27 // pred_check
          %p344 = pneg %p179
        $region42: #{tpu_custom_call.1} parent=27 // pred_check_branch
          %346 = sbr.rel (%p344) target = $region44
        $region43: #{tpu_custom_call.1} parent=27 // pred_region
          %p347 = scmp.lt.s32.totalorder %s18, 1
          %s348 = scalar_select %p347, %s18, 1
          %s349 = smul.addr %s348, 4
          %s350 = smul.addr %s349, 8
          %s351 = scalar_lea.vmem %s6, %s350
        $region44: #{tpu_custom_call.1} parent=27 // pred_fallthru
          _
        // Predicated region
        $region45: #{tpu_custom_call.1} parent=27 // pred_check
          %p352 = pneg %p205
        $region46: #{tpu_custom_call.1} parent=27 // pred_check_branch
          %354 = sbr.rel (%p352) target = $region48
        $region47: #{tpu_custom_call.1} parent=27 // pred_region
          %p355 = scmp.lt.s32.totalorder %s18, 1
          %s356 = scalar_select %p355, %s18, 1
          %s357 = scalar_lea.vmem %s7, %s356
        $region48: #{tpu_custom_call.1} parent=27 // pred_fallthru
          _
        // Predicated region
        $region49: #{tpu_custom_call.1} parent=27 // pred_check
          %p358 = pneg %p231
        $region50: #{tpu_custom_call.1} parent=27 // pred_check_branch
          %360 = sbr.rel (%p358) target = $region52
        $region51: #{tpu_custom_call.1} parent=27 // pred_region
          %p361 = scmp.lt.s32.totalorder %s18, 1
          %s362 = scalar_select %p361, %s18, 1
          %s363 = smul.addr %s362, 8
          %s364 = smul.addr %s363, 8
          %s365 = scalar_lea.vmem %s8, %s364
        $region52: #{tpu_custom_call.1} parent=27 // pred_fallthru
          _
        // Predicated region
        $region53: #{tpu_custom_call.1} parent=27 // pred_check
          %p366 = pneg %p257
        $region54: #{tpu_custom_call.1} parent=27 // pred_check_branch
          %368 = sbr.rel (%p366) target = $region56
        $region55: #{tpu_custom_call.1} parent=27 // pred_region
          %p369 = scmp.lt.s32.totalorder %s18, 1
          %s370 = scalar_select %p369, %s18, 1
          %s371 = smul.addr %s370, 8
          %s372 = scalar_lea.vmem %s9, %s371
        $region56: #{tpu_custom_call.1} parent=27 // pred_fallthru
          _
      $region28: #{tpu_custom_call.1} parent=5 // pred_fallthru
        _
      %p373 = scmp.le.s32.totalorder 1, %s18
      %p374 = scmp.lt.s32.totalorder %s18, 3
      %p375 = pnand %p373, %p374
      %p376 = pneg %p375
      // Predicated region
      $region57: #{tpu_custom_call.1} parent=5 // pred_check
        _
      $region58: #{tpu_custom_call.1} parent=5 // pred_check_branch
        %378 = sbr.rel (%p375) target = $region60
      $region59: #{tpu_custom_call.1} parent=5 // pred_region
        %s379 = ssub.s32 %s18, 1
        // Predicated region
        $region61: #{tpu_custom_call.1} parent=59 // pred_check
          %p380 = pneg %p60
        $region62: #{tpu_custom_call.1} parent=59 // pred_check_branch
          %382 = sbr.rel (%p380) target = $region64
        $region63: #{tpu_custom_call.1} parent=59 // pred_region
          %383 = dma.done [#allocation3], 256
        $region64: #{tpu_custom_call.1} parent=59 // pred_fallthru
          _
        %p384 = pneg %p39
        %p385 = pneg %p36
        %p386 = pneg %p60
        %p387 = pneg %p57
        %p388 = pneg %p81
        %p389 = pneg %p78
        %p390 = scmp.lt.s32.totalorder %s23, 1
        %s391 = scalar_select %p390, %s23, 1
        %s392 = smul.addr %s391, 4
        %s393 = smul.addr %s392, 8
        %s394 = scalar_lea.vmem %s3, %s393
        %p395 = pneg %p107
        %p396 = pneg %p104
        %p397 = scmp.lt.s32.totalorder %s23, 1
        %s398 = scalar_select %p397, %s23, 1
        %s399 = scalar_lea.vmem %s4, %s398
        %p400 = pneg %p133
        %p401 = pneg %p130
        %p402 = scmp.lt.s32.totalorder %s23, 1
        %s403 = scalar_select %p402, %s23, 1
        %s404 = smul.addr %s403, 4
        %s405 = smul.addr %s404, 8
        %s406 = scalar_lea.vmem %s5, %s405
        %p407 = pneg %p159
        %p408 = pneg %p156
        %p409 = scmp.lt.s32.totalorder %s23, 1
        %s410 = scalar_select %p409, %s23, 1
        %s411 = smul.addr %s410, 4
        %s412 = smul.addr %s411, 8
        %s413 = scalar_lea.vmem %s6, %s412
        %p414 = pneg %p185
        %p415 = pneg %p182
        %p416 = scmp.lt.s32.totalorder %s23, 1
        %s417 = scalar_select %p416, %s23, 1
        %s418 = scalar_lea.vmem %s7, %s417
        %p419 = pneg %p211
        %p420 = pneg %p208
        %p421 = scmp.lt.s32.totalorder %s23, 1
        %s422 = scalar_select %p421, %s23, 1
        %s423 = smul.addr %s422, 8
        %s424 = smul.addr %s423, 8
        %s425 = scalar_lea.vmem %s8, %s424
        %p426 = pneg %p237
        %p427 = pneg %p234
        %p428 = scmp.lt.s32.totalorder %s23, 1
        %s429 = scalar_select %p428, %s23, 1
        %s430 = smul.addr %s429, 8
        %s431 = scalar_lea.vmem %s9, %s430
        %p432 = pneg %p263
        %p433 = pneg %p260
        %p434 = pneg %p284
        %p435 = pneg %p281
        %p436 = scmp.lt.s32.totalorder %s23, 1
        %s437 = scalar_select %p436, %s23, 1
        %s438 = smul.addr %s437, 4
        %s439 = smul.addr %s438, 8
        %s440 = scalar_lea.vmem %s3, %s439
        %p441 = scmp.lt.s32.totalorder %s23, 1
        %s442 = scalar_select %p441, %s23, 1
        %s443 = scalar_lea.vmem %s4, %s442
        %p444 = scmp.lt.s32.totalorder %s23, 1
        %s445 = scalar_select %p444, %s23, 1
        %s446 = smul.addr %s445, 4
        %s447 = smul.addr %s446, 8
        %s448 = scalar_lea.vmem %s5, %s447
        %p449 = scmp.lt.s32.totalorder %s23, 1
        %s450 = scalar_select %p449, %s23, 1
        %s451 = smul.addr %s450, 4
        %s452 = smul.addr %s451, 8
        %s453 = scalar_lea.vmem %s6, %s452
        %p454 = scmp.lt.s32.totalorder %s23, 1
        %s455 = scalar_select %p454, %s23, 1
        %s456 = scalar_lea.vmem %s7, %s455
        %p457 = scmp.lt.s32.totalorder %s23, 1
        %s458 = scalar_select %p457, %s23, 1
        %s459 = smul.addr %s458, 8
        %s460 = smul.addr %s459, 8
        %s461 = scalar_lea.vmem %s8, %s460
        %p462 = scmp.lt.s32.totalorder %s23, 1
        %s463 = scalar_select %p462, %s23, 1
        %s464 = smul.addr %s463, 8
        %s465 = scalar_lea.vmem %s9, %s464
        %p466 = scmp.eq.s32.totalorder %s23, 0
        // Predicated region
        $region65: #{tpu_custom_call.1} parent=59 // pred_check
          %p467 = pneg %p466
        $region66: #{tpu_custom_call.1} parent=59 // pred_check_branch
          %469 = sbr.rel (%p467) target = $region68
        $region67: #{tpu_custom_call.1} parent=59 // pred_region
          %v470 = vld [vmem:[%s0] sm:$0xff]
          %v471 = vld [vmem:[%s0 + $0x8] sm:$0xff]
          %v472 = vld [vmem:[%s2] sm:$0x1]
          %v473 = vld [vmem:[%s2 + $0x1] sm:$0x1]
          %vm474 = vcmask 261120
          %v475 = vsel %vm474, %v470, 0.0
          %476 = vadd.xlane.f32.xlu0 %v475
          %v477 = vpop.xlane.xlu0 %476
          %v478 = vsel %vm474, %v471, 0.0
          %479 = vadd.xlane.f32.xlu0 %v478
          %v480 = vpop.xlane.xlu0 %479
          %v481 = vrcp.pop 32.0
          %v482 = vmul.f32 %v477, %v481
          %v483 = vmul.f32 %v480, %v481
          %v484 = vsub.f32 %v470, %v482
          %v485 = vsub.f32 %v471, %v483
          %v486 = vmul.f32 %v484, %v484
          %v487 = vmul.f32 %v485, %v485
          %v488 = vsel %vm474, %v486, 0.0
          %489 = vadd.xlane.f32.xlu0 %v488
          %v490 = vpop.xlane.xlu0 %489
          %v491 = vsel %vm474, %v487, 0.0
          %492 = vadd.xlane.f32.xlu0 %v491
          %v493 = vpop.xlane.xlu0 %492
          %v494 = vmul.f32 %v490, %v481
          %v495 = vmul.f32 %v493, %v481
          %v496 = vadd.f32 %v494, 1e-12
          %v497 = vadd.f32 %v495, 1e-12
          %v498 = vrsqrt.pop %v496
          %v499 = vrsqrt.pop %v497
          %v500 = vmul.f32 %v484, %v498
          %v501 = vmul.f32 %v485, %v499
          %v502 = vlaneseq
          %v503 = vshrl.u32 %v502, 7
          %v504 = vsub.s32 0, %v503
          %v505 = vrot.slane %v472, %v504
          %v506 = vmul.f32 %v500, %v505
          %v507 = vmul.f32 %v501, %v505
          %v508 = vlaneseq
          %v509 = vshrl.u32 %v508, 7
          %v510 = vsub.s32 0, %v509
          %v511 = vrot.slane %v473, %v510
          %v512 = vadd.f32 %v506, %v511
          %v513 = vadd.f32 %v507, %v511
          %514 = vst.msk [vmem:[#allocation5] sm:$0xff] %vm474, %v512
          %515 = vst.msk [vmem:[#allocation5 + $0x8] sm:$0xff] %vm474, %v513
        $region68: #{tpu_custom_call.1} parent=59 // pred_fallthru
          _
        %v516 = vld [vmem:[#allocation5] sm:$0xff]
        %v517 = vld [vmem:[#allocation5 + $0x8] sm:$0xff]
        %v518 = vld [vmem:[#allocation2] sm:$0xff]
        %v519 = vld [vmem:[#allocation2 + $0x8] sm:$0xff]
        %v520 = vld [vmem:[%s465] sm:$0x3f]
        %v521 = vld [vmem:[%s440] sm:$0xff]
        %v522 = vld [vmem:[%s440 + $0x8] sm:$0xff]
        %v523 = vld [vmem:[%s440 + $0x10] sm:$0xff]
        %v524 = vld [vmem:[%s440 + $0x18] sm:$0xff]
        %v525 = vld [vmem:[%s443] sm:$0x1]
        %v527 = vlaneseq
        %v528 = vshrl.u32 %v527, 7
        %v529 = vsub.s32 0, %v528
        %v530 = vrot.slane %v525, %v529
        %vm532 = vcmask 261120
        %v534 = vsel %vm532, %v516, 0
        %v537 = vsel %vm532, %v517, 0
        %539 = vmatprep.subr.mxu0 0.0
        %540 = vmatpush1.msra.mxu0 0.0
        %541 = vmatprep.subr.mxu0 0.0
        %542 = vmatpush1.msra.mxu0 0.0
        %543 = vmatprep.subr.mxu0 0.0
        %544 = vmatpush1.msra.mxu0 0.0
        %545 = vmatprep.subr.mxu0 0.0
        %546 = vmatpush1.msra.mxu0 0.0
        %547 = vmatprep.subr.mxu0 0.0
        %548 = vmatpush1.msra.mxu0 0.0
        %549 = vmatprep.subr.mxu0 0.0
        %550 = vmatpush1.msra.mxu0 0.0
        %551 = vmatprep.subr.mxu0 0.0
        %552 = vmatpush1.msra.mxu0 0.0
        %553 = vmatprep.subr.mxu0 0.0
        %554 = vmatpush1.msra.mxu0 0.0
        %555 = vmatprep.subr.mxu0 0.0
        %556 = vmatpush1.msra.mxu0 0.0
        %557 = vmatprep.subr.mxu0 0.0
        %558 = vmatpush1.msra.mxu0 0.0
        %559 = vmatprep.subr.mxu0 0.0
        %560 = vmatpush1.msra.mxu0 0.0
        %561 = vmatprep.subr.mxu0 0.0
        %562 = vmatpush1.msra.mxu0 0.0
        %563 = vmatprep.subr.mxu0 0.0
        %564 = vmatpush1.msra.mxu0 %v524
        %565 = vmatprep.subr.mxu0 0.0
        %566 = vmatpush1.msra.mxu0 %v523
        %567 = vmatprep.subr.mxu0 0.0
        %568 = vmatpush1.msra.mxu0 %v522
        %569 = vmatprep.subr.mxu0 0.0
        %570 = vmatpush1.msra.mxu0 %v521
        %571 = vmatprep.subr.mxu0 0.0
        %572 = vmatpush2.msra.mxu0 0.0
        %573 = vmatprep.subr.mxu0 0.0
        %574 = vmatpush2.msra.mxu0 0.0
        %575 = vmatprep.subr.mxu0 0.0
        %576 = vmatpush2.msra.mxu0 0.0
        %577 = vmatprep.subr.mxu0 0.0
        %578 = vmatpush2.msra.mxu0 0.0
        %579 = vmatprep.subr.mxu0 0.0
        %580 = vmatpush2.msra.mxu0 0.0
        %581 = vmatprep.subr.mxu0 0.0
        %582 = vmatpush2.msra.mxu0 0.0
        %583 = vmatprep.subr.mxu0 0.0
        %584 = vmatpush2.msra.mxu0 0.0
        %585 = vmatprep.subr.mxu0 0.0
        %586 = vmatpush2.msra.mxu0 0.0
        %587 = vmatprep.subr.mxu0 0.0
        %588 = vmatpush2.msra.mxu0 0.0
        %589 = vmatprep.subr.mxu0 0.0
        %590 = vmatpush2.msra.mxu0 0.0
        %591 = vmatprep.subr.mxu0 0.0
        %592 = vmatpush2.msra.mxu0 0.0
        %593 = vmatprep.subr.mxu0 0.0
        %594 = vmatpush2.msra.mxu0 0.0
        %595 = vmatprep.subr.mxu0 0.0
        %596 = vmatpush2.msra.mxu0 0.0
        %597 = vmatprep.subr.mxu0 0.0
        %598 = vmatpush2.msra.mxu0 0.0
        %599 = vmatprep.subr.mxu0 0.0
        %600 = vmatpush2.msra.mxu0 0.0
        %601 = vmatprep.subr.mxu0 0.0
        %602 = vmatpush2.msra.mxu0 0.0
        %603 = vmatprep.mubr.f32.mxu0 0.0
        %604 = vmatmul.mubr.f32.gmra.mxu0 %v534
        %v605 = vpop.f32.mrf.mxu0
        %v606 = vadd.f32 %v530, %v605
        %v607 = vpop.f32.mrf.mxu0
        %608 = vmatprep.mubr.f32.mxu0 0.0
        %609 = vmatmul.mubr.f32.gmra.mxu0 %v537
        %v610 = vpop.f32.mrf.mxu0
        %v611 = vadd.f32 %v530, %v610
        %v612 = vpop.f32.mrf.mxu0
        %613 = vdwg.mxu0
        %616 = vrot.lane.b32.xlu0 %v606, 96
        %v617 = vpop.permute.xlu0 %616
        %618 = vrot.lane.b32.xlu0 %v611, 96
        %v619 = vpop.permute.xlu0 %618
        %vm620 = vcmask 130048
        %v621 = vsel %vm620, %v606, 0
        %v623 = vsel %vm620, %v611, 0
        %v625 = vsel %vm620, %v617, 0
        %v627 = vsel %vm620, %v619, 0
        %629 = vmatprep.subr.mxu0 0.0
        %630 = vmatpush1.xpose.msra.mxu0 0.0
        %631 = vmatprep.subr.mxu0 0.0
        %632 = vmatpush1.xpose.msra.mxu0 0.0
        %633 = vmatprep.subr.mxu0 0.0
        %634 = vmatpush1.xpose.msra.mxu0 0.0
        %635 = vmatprep.subr.mxu0 0.0
        %636 = vmatpush1.xpose.msra.mxu0 0.0
        %637 = vmatprep.subr.mxu0 0.0
        %638 = vmatpush1.xpose.msra.mxu0 0.0
        %639 = vmatprep.subr.mxu0 0.0
        %640 = vmatpush1.xpose.msra.mxu0 0.0
        %641 = vmatprep.subr.mxu0 0.0
        %642 = vmatpush1.xpose.msra.mxu0 0.0
        %643 = vmatprep.subr.mxu0 0.0
        %644 = vmatpush1.xpose.msra.mxu0 0.0
        %645 = vmatprep.subr.mxu0 0.0
        %646 = vmatpush1.xpose.msra.mxu0 0.0
        %647 = vmatprep.subr.mxu0 0.0
        %648 = vmatpush1.xpose.msra.mxu0 0.0
        %649 = vmatprep.subr.mxu0 0.0
        %650 = vmatpush1.xpose.msra.mxu0 0.0
        %651 = vmatprep.subr.mxu0 0.0
        %652 = vmatpush1.xpose.msra.mxu0 0.0
        %653 = vmatprep.subr.mxu0 0.0
        %654 = vmatpush1.xpose.msra.mxu0 0.0
        %655 = vmatprep.subr.mxu0 0.0
        %656 = vmatpush1.xpose.msra.mxu0 0.0
        %657 = vmatprep.subr.mxu0 0.0
        %658 = vmatpush1.xpose.msra.mxu0 %v627
        %659 = vmatprep.subr.mxu0 0.0
        %660 = vmatpush1.xpose.msra.mxu0 %v625
        %661 = vmatprep.subr.mxu0 0.0
        %662 = vmatpush2.xpose.msra.mxu0 0.0
        %663 = vmatprep.subr.mxu0 0.0
        %664 = vmatpush2.xpose.msra.mxu0 0.0
        %665 = vmatprep.subr.mxu0 0.0
        %666 = vmatpush2.xpose.msra.mxu0 0.0
        %667 = vmatprep.subr.mxu0 0.0
        %668 = vmatpush2.xpose.msra.mxu0 0.0
        %669 = vmatprep.subr.mxu0 0.0
        %670 = vmatpush2.xpose.msra.mxu0 0.0
        %671 = vmatprep.subr.mxu0 0.0
        %672 = vmatpush2.xpose.msra.mxu0 0.0
        %673 = vmatprep.subr.mxu0 0.0
        %674 = vmatpush2.xpose.msra.mxu0 0.0
        %675 = vmatprep.subr.mxu0 0.0
        %676 = vmatpush2.xpose.msra.mxu0 0.0
        %677 = vmatprep.subr.mxu0 0.0
        %678 = vmatpush2.xpose.msra.mxu0 0.0
        %679 = vmatprep.subr.mxu0 0.0
        %680 = vmatpush2.xpose.msra.mxu0 0.0
        %681 = vmatprep.subr.mxu0 0.0
        %682 = vmatpush2.xpose.msra.mxu0 0.0
        %683 = vmatprep.subr.mxu0 0.0
        %684 = vmatpush2.xpose.msra.mxu0 0.0
        %685 = vmatprep.subr.mxu0 0.0
        %686 = vmatpush2.xpose.msra.mxu0 0.0
        %687 = vmatprep.subr.mxu0 0.0
        %688 = vmatpush2.xpose.msra.mxu0 0.0
        %689 = vmatprep.subr.mxu0 0.0
        %690 = vmatpush2.xpose.msra.mxu0 0.0
        %691 = vmatprep.subr.mxu0 0.0
        %692 = vmatpush2.xpose.msra.mxu0 0.0
        %693 = vmatprep.mubr.f32.mxu0 0.0
        %694 = vmatmul.mubr.f32.gmra.mxu0 %v621
        %v695 = vpop.f32.mrf.mxu0
        %v696 = vadd.f32 0.0, %v695
        %v697 = vpop.f32.mrf.mxu0
        %698 = vmatprep.mubr.f32.mxu0 0.0
        %699 = vmatmul.mubr.f32.gmra.mxu0 %v623
        %v700 = vpop.f32.mrf.mxu0
        %v701 = vadd.f32 0.0, %v700
        %v702 = vpop.f32.mrf.mxu0
        %703 = vdwg.mxu0
        %v704 = vmul.f32 %v696, 0.25
        %v705 = vmul.f32 %v701, 0.25
        %v706 = vadd.f32 %v704, %v518
        %v707 = vadd.f32 %v705, %v519
        %v708 = vsel %vm620, %v706, -inf
        %709 = vmax.xlane.f32.xlu0 %v708
        %v710 = vpop.xlane.xlu0 %709
        %v711 = vsel %vm620, %v707, -inf
        %712 = vmax.xlane.f32.xlu0 %v711
        %v713 = vpop.xlane.xlu0 %712
        %v714 = vsub.f32 %v706, %v710
        %v715 = vsub.f32 %v707, %v713
        %v716 = vmul.f32 %v714, 1.442695
        %v717 = vpow.pop %v716
        %v718 = vmul.f32 %v715, 1.442695
        %v719 = vpow.pop %v718
        %v720 = vsel %vm620, %v717, 0.0
        %721 = vadd.xlane.f32.xlu0 %v720
        %v722 = vpop.xlane.xlu0 %721
        %v723 = vsel %vm620, %v719, 0.0
        %724 = vadd.xlane.f32.xlu0 %v723
        %v725 = vpop.xlane.xlu0 %724
        %v726 = vrcp.pop %v722
        %v727 = vrcp.pop %v725
        %v728 = vmul.f32 %v717, %v726
        %v729 = vmul.f32 %v719, %v727
        %730 = vrot.lane.b32.xlu0 %v606, 64
        %v731 = vpop.permute.xlu0 %730
        %732 = vrot.lane.b32.xlu0 %v611, 64
        %v733 = vpop.permute.xlu0 %732
        %v737 = vsel %vm620, %v728, 0
        %v740 = vsel %vm620, %v729, 0
        %742 = vmatprep.subr.mxu0 0.0
        %743 = vmatpush1.msra.mxu0 0.0
        %744 = vmatprep.subr.mxu0 0.0
        %745 = vmatpush1.msra.mxu0 0.0
        %746 = vmatprep.subr.mxu0 0.0
        %747 = vmatpush1.msra.mxu0 0.0
        %748 = vmatprep.subr.mxu0 0.0
        %749 = vmatpush1.msra.mxu0 0.0
        %750 = vmatprep.subr.mxu0 0.0
        %751 = vmatpush1.msra.mxu0 0.0
        %752 = vmatprep.subr.mxu0 0.0
        %753 = vmatpush1.msra.mxu0 0.0
        %754 = vmatprep.subr.mxu0 0.0
        %755 = vmatpush1.msra.mxu0 0.0
        %756 = vmatprep.subr.mxu0 0.0
        %757 = vmatpush1.msra.mxu0 0.0
        %758 = vmatprep.subr.mxu0 0.0
        %759 = vmatpush1.msra.mxu0 0.0
        %760 = vmatprep.subr.mxu0 0.0
        %761 = vmatpush1.msra.mxu0 0.0
        %762 = vmatprep.subr.mxu0 0.0
        %763 = vmatpush1.msra.mxu0 0.0
        %764 = vmatprep.subr.mxu0 0.0
        %765 = vmatpush1.msra.mxu0 0.0
        %766 = vmatprep.subr.mxu0 0.0
        %767 = vmatpush1.msra.mxu0 0.0
        %768 = vmatprep.subr.mxu0 0.0
        %769 = vmatpush1.msra.mxu0 0.0
        %770 = vmatprep.subr.mxu0 0.0
        %771 = vmatpush1.msra.mxu0 %v733
        %772 = vmatprep.subr.mxu0 0.0
        %773 = vmatpush1.msra.mxu0 %v731
        %774 = vmatprep.subr.mxu0 0.0
        %775 = vmatpush2.msra.mxu0 0.0
        %776 = vmatprep.subr.mxu0 0.0
        %777 = vmatpush2.msra.mxu0 0.0
        %778 = vmatprep.subr.mxu0 0.0
        %779 = vmatpush2.msra.mxu0 0.0
        %780 = vmatprep.subr.mxu0 0.0
        %781 = vmatpush2.msra.mxu0 0.0
        %782 = vmatprep.subr.mxu0 0.0
        %783 = vmatpush2.msra.mxu0 0.0
        %784 = vmatprep.subr.mxu0 0.0
        %785 = vmatpush2.msra.mxu0 0.0
        %786 = vmatprep.subr.mxu0 0.0
        %787 = vmatpush2.msra.mxu0 0.0
        %788 = vmatprep.subr.mxu0 0.0
        %789 = vmatpush2.msra.mxu0 0.0
        %790 = vmatprep.subr.mxu0 0.0
        %791 = vmatpush2.msra.mxu0 0.0
        %792 = vmatprep.subr.mxu0 0.0
        %793 = vmatpush2.msra.mxu0 0.0
        %794 = vmatprep.subr.mxu0 0.0
        %795 = vmatpush2.msra.mxu0 0.0
        %796 = vmatprep.subr.mxu0 0.0
        %797 = vmatpush2.msra.mxu0 0.0
        %798 = vmatprep.subr.mxu0 0.0
        %799 = vmatpush2.msra.mxu0 0.0
        %800 = vmatprep.subr.mxu0 0.0
        %801 = vmatpush2.msra.mxu0 0.0
        %802 = vmatprep.subr.mxu0 0.0
        %803 = vmatpush2.msra.mxu0 0.0
        %804 = vmatprep.subr.mxu0 0.0
        %805 = vmatpush2.msra.mxu0 0.0
        %806 = vmatprep.mubr.f32.mxu0 0.0
        %807 = vmatmul.mubr.f32.gmra.mxu0 %v737
        %v808 = vpop.f32.mrf.mxu0
        %v809 = vadd.f32 0.0, %v808
        %v810 = vpop.f32.mrf.mxu0
        %811 = vmatprep.mubr.f32.mxu0 0.0
        %812 = vmatmul.mubr.f32.gmra.mxu0 %v740
        %v813 = vpop.f32.mrf.mxu0
        %v814 = vadd.f32 0.0, %v813
        %v815 = vpop.f32.mrf.mxu0
        %816 = vdwg.mxu0
        %817 = vrot.lane.b32.xlu0 %v606, 112
        %v818 = vpop.permute.xlu0 %817
        %819 = vrot.lane.b32.xlu0 %v611, 112
        %v820 = vpop.permute.xlu0 %819
        %821 = vrot.lane.b32.xlu0 %v606, 80
        %v822 = vpop.permute.xlu0 %821
        %823 = vrot.lane.b32.xlu0 %v611, 80
        %v824 = vpop.permute.xlu0 %823
        %v825 = vsel %vm620, %v818, 0
        %v827 = vsel %vm620, %v820, 0
        %v829 = vsel %vm620, %v822, 0
        %v831 = vsel %vm620, %v824, 0
        %833 = vmatprep.subr.mxu0 0.0
        %834 = vmatpush1.xpose.msra.mxu0 0.0
        %835 = vmatprep.subr.mxu0 0.0
        %836 = vmatpush1.xpose.msra.mxu0 0.0
        %837 = vmatprep.subr.mxu0 0.0
        %838 = vmatpush1.xpose.msra.mxu0 0.0
        %839 = vmatprep.subr.mxu0 0.0
        %840 = vmatpush1.xpose.msra.mxu0 0.0
        %841 = vmatprep.subr.mxu0 0.0
        %842 = vmatpush1.xpose.msra.mxu0 0.0
        %843 = vmatprep.subr.mxu0 0.0
        %844 = vmatpush1.xpose.msra.mxu0 0.0
        %845 = vmatprep.subr.mxu0 0.0
        %846 = vmatpush1.xpose.msra.mxu0 0.0
        %847 = vmatprep.subr.mxu0 0.0
        %848 = vmatpush1.xpose.msra.mxu0 0.0
        %849 = vmatprep.subr.mxu0 0.0
        %850 = vmatpush1.xpose.msra.mxu0 0.0
        %851 = vmatprep.subr.mxu0 0.0
        %852 = vmatpush1.xpose.msra.mxu0 0.0
        %853 = vmatprep.subr.mxu0 0.0
        %854 = vmatpush1.xpose.msra.mxu0 0.0
        %855 = vmatprep.subr.mxu0 0.0
        %856 = vmatpush1.xpose.msra.mxu0 0.0
        %857 = vmatprep.subr.mxu0 0.0
        %858 = vmatpush1.xpose.msra.mxu0 0.0
        %859 = vmatprep.subr.mxu0 0.0
        %860 = vmatpush1.xpose.msra.mxu0 0.0
        %861 = vmatprep.subr.mxu0 0.0
        %862 = vmatpush1.xpose.msra.mxu0 %v831
        %863 = vmatprep.subr.mxu0 0.0
        %864 = vmatpush1.xpose.msra.mxu0 %v829
        %865 = vmatprep.subr.mxu0 0.0
        %866 = vmatpush2.xpose.msra.mxu0 0.0
        %867 = vmatprep.subr.mxu0 0.0
        %868 = vmatpush2.xpose.msra.mxu0 0.0
        %869 = vmatprep.subr.mxu0 0.0
        %870 = vmatpush2.xpose.msra.mxu0 0.0
        %871 = vmatprep.subr.mxu0 0.0
        %872 = vmatpush2.xpose.msra.mxu0 0.0
        %873 = vmatprep.subr.mxu0 0.0
        %874 = vmatpush2.xpose.msra.mxu0 0.0
        %875 = vmatprep.subr.mxu0 0.0
        %876 = vmatpush2.xpose.msra.mxu0 0.0
        %877 = vmatprep.subr.mxu0 0.0
        %878 = vmatpush2.xpose.msra.mxu0 0.0
        %879 = vmatprep.subr.mxu0 0.0
        %880 = vmatpush2.xpose.msra.mxu0 0.0
        %881 = vmatprep.subr.mxu0 0.0
        %882 = vmatpush2.xpose.msra.mxu0 0.0
        %883 = vmatprep.subr.mxu0 0.0
        %884 = vmatpush2.xpose.msra.mxu0 0.0
        %885 = vmatprep.subr.mxu0 0.0
        %886 = vmatpush2.xpose.msra.mxu0 0.0
        %887 = vmatprep.subr.mxu0 0.0
        %888 = vmatpush2.xpose.msra.mxu0 0.0
        %889 = vmatprep.subr.mxu0 0.0
        %890 = vmatpush2.xpose.msra.mxu0 0.0
        %891 = vmatprep.subr.mxu0 0.0
        %892 = vmatpush2.xpose.msra.mxu0 0.0
        %893 = vmatprep.subr.mxu0 0.0
        %894 = vmatpush2.xpose.msra.mxu0 0.0
        %895 = vmatprep.subr.mxu0 0.0
        %896 = vmatpush2.xpose.msra.mxu0 0.0
        %897 = vmatprep.mubr.f32.mxu0 0.0
        %898 = vmatmul.mubr.f32.gmra.mxu0 %v825
        %v899 = vpop.f32.mrf.mxu0
        %v900 = vadd.f32 0.0, %v899
        %v901 = vpop.f32.mrf.mxu0
        %902 = vmatprep.mubr.f32.mxu0 0.0
        %903 = vmatmul.mubr.f32.gmra.mxu0 %v827
        %v904 = vpop.f32.mrf.mxu0
        %v905 = vadd.f32 0.0, %v904
        %v906 = vpop.f32.mrf.mxu0
        %907 = vdwg.mxu0
        %v908 = vmul.f32 %v900, 0.25
        %v909 = vmul.f32 %v905, 0.25
        %v910 = vadd.f32 %v908, %v518
        %v911 = vadd.f32 %v909, %v519
        %v912 = vsel %vm620, %v910, -inf
        %913 = vmax.xlane.f32.xlu0 %v912
        %v914 = vpop.xlane.xlu0 %913
        %v915 = vsel %vm620, %v911, -inf
        %916 = vmax.xlane.f32.xlu0 %v915
        %v917 = vpop.xlane.xlu0 %916
        %v918 = vsub.f32 %v910, %v914
        %v919 = vsub.f32 %v911, %v917
        %v920 = vmul.f32 %v918, 1.442695
        %v921 = vpow.pop %v920
        %v922 = vmul.f32 %v919, 1.442695
        %v923 = vpow.pop %v922
        %v924 = vsel %vm620, %v921, 0.0
        %925 = vadd.xlane.f32.xlu0 %v924
        %v926 = vpop.xlane.xlu0 %925
        %v927 = vsel %vm620, %v923, 0.0
        %928 = vadd.xlane.f32.xlu0 %v927
        %v929 = vpop.xlane.xlu0 %928
        %v930 = vrcp.pop %v926
        %v931 = vrcp.pop %v929
        %v932 = vmul.f32 %v921, %v930
        %v933 = vmul.f32 %v923, %v931
        %934 = vrot.lane.b32.xlu0 %v606, 48
        %v935 = vpop.permute.xlu0 %934
        %936 = vrot.lane.b32.xlu0 %v611, 48
        %v937 = vpop.permute.xlu0 %936
        %v941 = vsel %vm620, %v932, 0
        %v944 = vsel %vm620, %v933, 0
        %946 = vmatprep.subr.mxu0 0.0
        %947 = vmatpush1.msra.mxu0 0.0
        %948 = vmatprep.subr.mxu0 0.0
        %949 = vmatpush1.msra.mxu0 0.0
        %950 = vmatprep.subr.mxu0 0.0
        %951 = vmatpush1.msra.mxu0 0.0
        %952 = vmatprep.subr.mxu0 0.0
        %953 = vmatpush1.msra.mxu0 0.0
        %954 = vmatprep.subr.mxu0 0.0
        %955 = vmatpush1.msra.mxu0 0.0
        %956 = vmatprep.subr.mxu0 0.0
        %957 = vmatpush1.msra.mxu0 0.0
        %958 = vmatprep.subr.mxu0 0.0
        %959 = vmatpush1.msra.mxu0 0.0
        %960 = vmatprep.subr.mxu0 0.0
        %961 = vmatpush1.msra.mxu0 0.0
        %962 = vmatprep.subr.mxu0 0.0
        %963 = vmatpush1.msra.mxu0 0.0
        %964 = vmatprep.subr.mxu0 0.0
        %965 = vmatpush1.msra.mxu0 0.0
        %966 = vmatprep.subr.mxu0 0.0
        %967 = vmatpush1.msra.mxu0 0.0
        %968 = vmatprep.subr.mxu0 0.0
        %969 = vmatpush1.msra.mxu0 0.0
        %970 = vmatprep.subr.mxu0 0.0
        %971 = vmatpush1.msra.mxu0 0.0
        %972 = vmatprep.subr.mxu0 0.0
        %973 = vmatpush1.msra.mxu0 0.0
        %974 = vmatprep.subr.mxu0 0.0
        %975 = vmatpush1.msra.mxu0 %v937
        %976 = vmatprep.subr.mxu0 0.0
        %977 = vmatpush1.msra.mxu0 %v935
        %978 = vmatprep.subr.mxu0 0.0
        %979 = vmatpush2.msra.mxu0 0.0
        %980 = vmatprep.subr.mxu0 0.0
        %981 = vmatpush2.msra.mxu0 0.0
        %982 = vmatprep.subr.mxu0 0.0
        %983 = vmatpush2.msra.mxu0 0.0
        %984 = vmatprep.subr.mxu0 0.0
        %985 = vmatpush2.msra.mxu0 0.0
        %986 = vmatprep.subr.mxu0 0.0
        %987 = vmatpush2.msra.mxu0 0.0
        %988 = vmatprep.subr.mxu0 0.0
        %989 = vmatpush2.msra.mxu0 0.0
        %990 = vmatprep.subr.mxu0 0.0
        %991 = vmatpush2.msra.mxu0 0.0
        %992 = vmatprep.subr.mxu0 0.0
        %993 = vmatpush2.msra.mxu0 0.0
        %994 = vmatprep.subr.mxu0 0.0
        %995 = vmatpush2.msra.mxu0 0.0
        %996 = vmatprep.subr.mxu0 0.0
        %997 = vmatpush2.msra.mxu0 0.0
        %998 = vmatprep.subr.mxu0 0.0
        %999 = vmatpush2.msra.mxu0 0.0
        %1000 = vmatprep.subr.mxu0 0.0
        %1001 = vmatpush2.msra.mxu0 0.0
        %1002 = vmatprep.subr.mxu0 0.0
        %1003 = vmatpush2.msra.mxu0 0.0
        %1004 = vmatprep.subr.mxu0 0.0
        %1005 = vmatpush2.msra.mxu0 0.0
        %1006 = vmatprep.subr.mxu0 0.0
        %1007 = vmatpush2.msra.mxu0 0.0
        %1008 = vmatprep.subr.mxu0 0.0
        %1009 = vmatpush2.msra.mxu0 0.0
        %1010 = vmatprep.mubr.f32.mxu0 0.0
        %1011 = vmatmul.mubr.f32.gmra.mxu0 %v941
        %v1012 = vpop.f32.mrf.mxu0
        %v1013 = vadd.f32 0.0, %v1012
        %v1014 = vpop.f32.mrf.mxu0
        %1015 = vmatprep.mubr.f32.mxu0 0.0
        %1016 = vmatmul.mubr.f32.gmra.mxu0 %v944
        %v1017 = vpop.f32.mrf.mxu0
        %v1018 = vadd.f32 0.0, %v1017
        %v1019 = vpop.f32.mrf.mxu0
        %1020 = vdwg.mxu0
        %1023 = vrot.lane.b32.xlu0 %v1013, 16
        %v1024 = vpop.permute.xlu0 %1023
        %1025 = vrot.lane.b32.xlu0 %v1018, 16
        %v1026 = vpop.permute.xlu0 %1025
        %v1029 = vsel %vm620, %v809, %v1024
        %v1030 = vsel %vm620, %v814, %v1026
        %v1031 = vld [vmem:[%s448] sm:$0xff]
        %v1032 = vld [vmem:[%s448 + $0x8] sm:$0xff]
        %v1033 = vld [vmem:[%s448 + $0x10] sm:$0xff]
        %v1034 = vld [vmem:[%s448 + $0x18] sm:$0xff]
        %v1035 = vlaneseq
        %v1036 = vshrl.u32 %v1035, 7
        %v1037 = vsub.s32 0, %v1036
        %v1038 = vrot.slane %v520, %v1037
        %v1040 = vsel %vm532, %v1029, 0
        %v1043 = vsel %vm532, %v1030, 0
        %1045 = vmatprep.subr.mxu0 0.0
        %1046 = vmatpush1.msra.mxu0 0.0
        %1047 = vmatprep.subr.mxu0 0.0
        %1048 = vmatpush1.msra.mxu0 0.0
        %1049 = vmatprep.subr.mxu0 0.0
        %1050 = vmatpush1.msra.mxu0 0.0
        %1051 = vmatprep.subr.mxu0 0.0
        %1052 = vmatpush1.msra.mxu0 0.0
        %1053 = vmatprep.subr.mxu0 0.0
        %1054 = vmatpush1.msra.mxu0 0.0
        %1055 = vmatprep.subr.mxu0 0.0
        %1056 = vmatpush1.msra.mxu0 0.0
        %1057 = vmatprep.subr.mxu0 0.0
        %1058 = vmatpush1.msra.mxu0 0.0
        %1059 = vmatprep.subr.mxu0 0.0
        %1060 = vmatpush1.msra.mxu0 0.0
        %1061 = vmatprep.subr.mxu0 0.0
        %1062 = vmatpush1.msra.mxu0 0.0
        %1063 = vmatprep.subr.mxu0 0.0
        %1064 = vmatpush1.msra.mxu0 0.0
        %1065 = vmatprep.subr.mxu0 0.0
        %1066 = vmatpush1.msra.mxu0 0.0
        %1067 = vmatprep.subr.mxu0 0.0
        %1068 = vmatpush1.msra.mxu0 0.0
        %1069 = vmatprep.subr.mxu0 0.0
        %1070 = vmatpush1.msra.mxu0 %v1034
        %1071 = vmatprep.subr.mxu0 0.0
        %1072 = vmatpush1.msra.mxu0 %v1033
        %1073 = vmatprep.subr.mxu0 0.0
        %1074 = vmatpush1.msra.mxu0 %v1032
        %1075 = vmatprep.subr.mxu0 0.0
        %1076 = vmatpush1.msra.mxu0 %v1031
        %1077 = vmatprep.subr.mxu0 0.0
        %1078 = vmatpush2.msra.mxu0 0.0
        %1079 = vmatprep.subr.mxu0 0.0
        %1080 = vmatpush2.msra.mxu0 0.0
        %1081 = vmatprep.subr.mxu0 0.0
        %1082 = vmatpush2.msra.mxu0 0.0
        %1083 = vmatprep.subr.mxu0 0.0
        %1084 = vmatpush2.msra.mxu0 0.0
        %1085 = vmatprep.subr.mxu0 0.0
        %1086 = vmatpush2.msra.mxu0 0.0
        %1087 = vmatprep.subr.mxu0 0.0
        %1088 = vmatpush2.msra.mxu0 0.0
        %1089 = vmatprep.subr.mxu0 0.0
        %1090 = vmatpush2.msra.mxu0 0.0
        %1091 = vmatprep.subr.mxu0 0.0
        %1092 = vmatpush2.msra.mxu0 0.0
        %1093 = vmatprep.subr.mxu0 0.0
        %1094 = vmatpush2.msra.mxu0 0.0
        %1095 = vmatprep.subr.mxu0 0.0
        %1096 = vmatpush2.msra.mxu0 0.0
        %1097 = vmatprep.subr.mxu0 0.0
        %1098 = vmatpush2.msra.mxu0 0.0
        %1099 = vmatprep.subr.mxu0 0.0
        %1100 = vmatpush2.msra.mxu0 0.0
        %1101 = vmatprep.subr.mxu0 0.0
        %1102 = vmatpush2.msra.mxu0 0.0
        %1103 = vmatprep.subr.mxu0 0.0
        %1104 = vmatpush2.msra.mxu0 0.0
        %1105 = vmatprep.subr.mxu0 0.0
        %1106 = vmatpush2.msra.mxu0 0.0
        %1107 = vmatprep.subr.mxu0 0.0
        %1108 = vmatpush2.msra.mxu0 0.0
        %1109 = vmatprep.mubr.f32.mxu0 0.0
        %1110 = vmatmul.mubr.f32.gmra.mxu0 %v1040
        %v1111 = vpop.f32.mrf.mxu0
        %v1112 = vadd.f32 %v1038, %v1111
        %v1113 = vpop.f32.mrf.mxu0
        %1114 = vmatprep.mubr.f32.mxu0 0.0
        %1115 = vmatmul.mubr.f32.gmra.mxu0 %v1043
        %v1116 = vpop.f32.mrf.mxu0
        %v1117 = vadd.f32 %v1038, %v1116
        %v1118 = vpop.f32.mrf.mxu0
        %1119 = vdwg.mxu0
        %v1120 = vadd.f32 %v516, %v1112
        %v1121 = vadd.f32 %v517, %v1117
        %v1122 = vsel %vm532, %v1120, 0.0
        %1123 = vadd.xlane.f32.xlu0 %v1122
        %v1124 = vpop.xlane.xlu0 %1123
        %v1125 = vsel %vm532, %v1121, 0.0
        %1126 = vadd.xlane.f32.xlu0 %v1125
        %v1127 = vpop.xlane.xlu0 %1126
        %v1128 = vrcp.pop 32.0
        %v1129 = vmul.f32 %v1124, %v1128
        %v1130 = vmul.f32 %v1127, %v1128
        %v1131 = vsub.f32 %v1120, %v1129
        %v1132 = vsub.f32 %v1121, %v1130
        %v1133 = vmul.f32 %v1131, %v1131
        %v1134 = vmul.f32 %v1132, %v1132
        %v1135 = vsel %vm532, %v1133, 0.0
        %1136 = vadd.xlane.f32.xlu0 %v1135
        %v1137 = vpop.xlane.xlu0 %1136
        %v1138 = vsel %vm532, %v1134, 0.0
        %1139 = vadd.xlane.f32.xlu0 %v1138
        %v1140 = vpop.xlane.xlu0 %1139
        %v1141 = vmul.f32 %v1137, %v1128
        %v1142 = vmul.f32 %v1140, %v1128
        %v1143 = vadd.f32 %v1141, 1e-12
        %v1144 = vadd.f32 %v1142, 1e-12
        %v1145 = vrsqrt.pop %v1143
        %v1146 = vrsqrt.pop %v1144
        %v1147 = vmul.f32 %v1131, %v1145
        %v1148 = vmul.f32 %v1132, %v1146
        %v1149 = vlaneseq
        %v1150 = vshrl.u32 %v1149, 7
        %v1151 = vsub.s32 1, %v1150
        %v1152 = vrot.slane %v520, %v1151
        %v1153 = vmul.f32 %v1147, %v1152
        %v1154 = vmul.f32 %v1148, %v1152
        %v1155 = vlaneseq
        %v1156 = vshrl.u32 %v1155, 7
        %v1157 = vsub.s32 2, %v1156
        %v1158 = vrot.slane %v520, %v1157
        %v1159 = vadd.f32 %v1153, %v1158
        %v1160 = vadd.f32 %v1154, %v1158
        %v1161 = vld [vmem:[%s453] sm:$0xff]
        %v1162 = vld [vmem:[%s453 + $0x8] sm:$0xff]
        %v1163 = vld [vmem:[%s453 + $0x10] sm:$0xff]
        %v1164 = vld [vmem:[%s453 + $0x18] sm:$0xff]
        %v1165 = vld [vmem:[%s456] sm:$0x1]
        %v1167 = vlaneseq
        %v1168 = vshrl.u32 %v1167, 7
        %v1169 = vsub.s32 0, %v1168
        %v1170 = vrot.slane %v1165, %v1169
        %v1173 = vsel %vm532, %v1159, 0
        %v1176 = vsel %vm532, %v1160, 0
        %1178 = vmatprep.subr.mxu0 0.0
        %1179 = vmatpush1.msra.mxu0 0.0
        %1180 = vmatprep.subr.mxu0 0.0
        %1181 = vmatpush1.msra.mxu0 0.0
        %1182 = vmatprep.subr.mxu0 0.0
        %1183 = vmatpush1.msra.mxu0 0.0
        %1184 = vmatprep.subr.mxu0 0.0
        %1185 = vmatpush1.msra.mxu0 0.0
        %1186 = vmatprep.subr.mxu0 0.0
        %1187 = vmatpush1.msra.mxu0 0.0
        %1188 = vmatprep.subr.mxu0 0.0
        %1189 = vmatpush1.msra.mxu0 0.0
        %1190 = vmatprep.subr.mxu0 0.0
        %1191 = vmatpush1.msra.mxu0 0.0
        %1192 = vmatprep.subr.mxu0 0.0
        %1193 = vmatpush1.msra.mxu0 0.0
        %1194 = vmatprep.subr.mxu0 0.0
        %1195 = vmatpush1.msra.mxu0 0.0
        %1196 = vmatprep.subr.mxu0 0.0
        %1197 = vmatpush1.msra.mxu0 0.0
        %1198 = vmatprep.subr.mxu0 0.0
        %1199 = vmatpush1.msra.mxu0 0.0
        %1200 = vmatprep.subr.mxu0 0.0
        %1201 = vmatpush1.msra.mxu0 0.0
        %1202 = vmatprep.subr.mxu0 0.0
        %1203 = vmatpush1.msra.mxu0 %v1164
        %1204 = vmatprep.subr.mxu0 0.0
        %1205 = vmatpush1.msra.mxu0 %v1163
        %1206 = vmatprep.subr.mxu0 0.0
        %1207 = vmatpush1.msra.mxu0 %v1162
        %1208 = vmatprep.subr.mxu0 0.0
        %1209 = vmatpush1.msra.mxu0 %v1161
        %1210 = vmatprep.subr.mxu0 0.0
        %1211 = vmatpush2.msra.mxu0 0.0
        %1212 = vmatprep.subr.mxu0 0.0
        %1213 = vmatpush2.msra.mxu0 0.0
        %1214 = vmatprep.subr.mxu0 0.0
        %1215 = vmatpush2.msra.mxu0 0.0
        %1216 = vmatprep.subr.mxu0 0.0
        %1217 = vmatpush2.msra.mxu0 0.0
        %1218 = vmatprep.subr.mxu0 0.0
        %1219 = vmatpush2.msra.mxu0 0.0
        %1220 = vmatprep.subr.mxu0 0.0
        %1221 = vmatpush2.msra.mxu0 0.0
        %1222 = vmatprep.subr.mxu0 0.0
        %1223 = vmatpush2.msra.mxu0 0.0
        %1224 = vmatprep.subr.mxu0 0.0
        %1225 = vmatpush2.msra.mxu0 0.0
        %1226 = vmatprep.subr.mxu0 0.0
        %1227 = vmatpush2.msra.mxu0 0.0
        %1228 = vmatprep.subr.mxu0 0.0
        %1229 = vmatpush2.msra.mxu0 0.0
        %1230 = vmatprep.subr.mxu0 0.0
        %1231 = vmatpush2.msra.mxu0 0.0
        %1232 = vmatprep.subr.mxu0 0.0
        %1233 = vmatpush2.msra.mxu0 0.0
        %1234 = vmatprep.subr.mxu0 0.0
        %1235 = vmatpush2.msra.mxu0 0.0
        %1236 = vmatprep.subr.mxu0 0.0
        %1237 = vmatpush2.msra.mxu0 0.0
        %1238 = vmatprep.subr.mxu0 0.0
        %1239 = vmatpush2.msra.mxu0 0.0
        %1240 = vmatprep.subr.mxu0 0.0
        %1241 = vmatpush2.msra.mxu0 0.0
        %1242 = vmatprep.mubr.f32.mxu0 0.0
        %1243 = vmatmul.mubr.f32.gmra.mxu0 %v1173
        %v1244 = vpop.f32.mrf.mxu0
        %v1245 = vadd.f32 %v1170, %v1244
        %v1246 = vpop.f32.mrf.mxu0
        %1247 = vmatprep.mubr.f32.mxu0 0.0
        %1248 = vmatmul.mubr.f32.gmra.mxu0 %v1176
        %v1249 = vpop.f32.mrf.mxu0
        %v1250 = vadd.f32 %v1170, %v1249
        %v1251 = vpop.f32.mrf.mxu0
        %1252 = vdwg.mxu0
        %v1253 = vmul.f32 %v1245, 0.5
        %v1254 = vmul.f32 %v1250, 0.5
        %v1255 = vmul.f32 %v1245, 0.044715
        %v1256 = vmul.f32 %v1250, 0.044715
        %v1257 = vmul.f32 %v1255, %v1245
        %v1258 = vmul.f32 %v1256, %v1250
        %v1259 = vmul.f32 %v1257, %v1245
        %v1260 = vmul.f32 %v1258, %v1250
        %v1261 = vadd.f32 %v1245, %v1259
        %v1262 = vadd.f32 %v1250, %v1260
        %v1263 = vmul.f32 %v1261, 0.7978846
        %v1264 = vmul.f32 %v1262, 0.7978846
        %v1265 = vtanh.pop %v1263
        %v1266 = vtanh.pop %v1264
        %v1267 = vadd.f32 %v1265, 1.0
        %v1268 = vadd.f32 %v1266, 1.0
        %v1269 = vmul.f32 %v1253, %v1267
        %v1270 = vmul.f32 %v1254, %v1268
        %v1271 = vld [vmem:[%s461] sm:$0xff]
        %v1272 = vld [vmem:[%s461 + $0x8] sm:$0xff]
        %v1273 = vld [vmem:[%s461 + $0x10] sm:$0xff]
        %v1274 = vld [vmem:[%s461 + $0x18] sm:$0xff]
        %v1275 = vld [vmem:[%s461 + $0x20] sm:$0xff]
        %v1276 = vld [vmem:[%s461 + $0x28] sm:$0xff]
        %v1277 = vld [vmem:[%s461 + $0x30] sm:$0xff]
        %v1278 = vld [vmem:[%s461 + $0x38] sm:$0xff]
        %v1279 = vlaneseq
        %v1280 = vshrl.u32 %v1279, 7
        %v1281 = vsub.s32 3, %v1280
        %v1282 = vrot.slane %v520, %v1281
        %vm1283 = vcmask 523264
        %v1285 = vsel %vm1283, %v1269, 0
        %v1288 = vsel %vm1283, %v1270, 0
        %1290 = vmatprep.subr.mxu0 0.0
        %1291 = vmatpush1.msra.mxu0 0.0
        %1292 = vmatprep.subr.mxu0 0.0
        %1293 = vmatpush1.msra.mxu0 0.0
        %1294 = vmatprep.subr.mxu0 0.0
        %1295 = vmatpush1.msra.mxu0 0.0
        %1296 = vmatprep.subr.mxu0 0.0
        %1297 = vmatpush1.msra.mxu0 0.0
        %1298 = vmatprep.subr.mxu0 0.0
        %1299 = vmatpush1.msra.mxu0 0.0
        %1300 = vmatprep.subr.mxu0 0.0
        %1301 = vmatpush1.msra.mxu0 0.0
        %1302 = vmatprep.subr.mxu0 0.0
        %1303 = vmatpush1.msra.mxu0 0.0
        %1304 = vmatprep.subr.mxu0 0.0
        %1305 = vmatpush1.msra.mxu0 0.0
        %1306 = vmatprep.subr.mxu0 0.0
        %1307 = vmatpush1.msra.mxu0 %v1278
        %1308 = vmatprep.subr.mxu0 0.0
        %1309 = vmatpush1.msra.mxu0 %v1277
        %1310 = vmatprep.subr.mxu0 0.0
        %1311 = vmatpush1.msra.mxu0 %v1276
        %1312 = vmatprep.subr.mxu0 0.0
        %1313 = vmatpush1.msra.mxu0 %v1275
        %1314 = vmatprep.subr.mxu0 0.0
        %1315 = vmatpush1.msra.mxu0 %v1274
        %1316 = vmatprep.subr.mxu0 0.0
        %1317 = vmatpush1.msra.mxu0 %v1273
        %1318 = vmatprep.subr.mxu0 0.0
        %1319 = vmatpush1.msra.mxu0 %v1272
        %1320 = vmatprep.subr.mxu0 0.0
        %1321 = vmatpush1.msra.mxu0 %v1271
        %1322 = vmatprep.subr.mxu0 0.0
        %1323 = vmatpush2.msra.mxu0 0.0
        %1324 = vmatprep.subr.mxu0 0.0
        %1325 = vmatpush2.msra.mxu0 0.0
        %1326 = vmatprep.subr.mxu0 0.0
        %1327 = vmatpush2.msra.mxu0 0.0
        %1328 = vmatprep.subr.mxu0 0.0
        %1329 = vmatpush2.msra.mxu0 0.0
        %1330 = vmatprep.subr.mxu0 0.0
        %1331 = vmatpush2.msra.mxu0 0.0
        %1332 = vmatprep.subr.mxu0 0.0
        %1333 = vmatpush2.msra.mxu0 0.0
        %1334 = vmatprep.subr.mxu0 0.0
        %1335 = vmatpush2.msra.mxu0 0.0
        %1336 = vmatprep.subr.mxu0 0.0
        %1337 = vmatpush2.msra.mxu0 0.0
        %1338 = vmatprep.subr.mxu0 0.0
        %1339 = vmatpush2.msra.mxu0 0.0
        %1340 = vmatprep.subr.mxu0 0.0
        %1341 = vmatpush2.msra.mxu0 0.0
        %1342 = vmatprep.subr.mxu0 0.0
        %1343 = vmatpush2.msra.mxu0 0.0
        %1344 = vmatprep.subr.mxu0 0.0
        %1345 = vmatpush2.msra.mxu0 0.0
        %1346 = vmatprep.subr.mxu0 0.0
        %1347 = vmatpush2.msra.mxu0 0.0
        %1348 = vmatprep.subr.mxu0 0.0
        %1349 = vmatpush2.msra.mxu0 0.0
        %1350 = vmatprep.subr.mxu0 0.0
        %1351 = vmatpush2.msra.mxu0 0.0
        %1352 = vmatprep.subr.mxu0 0.0
        %1353 = vmatpush2.msra.mxu0 0.0
        %1354 = vmatprep.mubr.f32.mxu0 0.0
        %1355 = vmatmul.mubr.f32.gmra.mxu0 %v1285
        %v1356 = vpop.f32.mrf.mxu0
        %v1357 = vadd.f32 %v1282, %v1356
        %v1358 = vpop.f32.mrf.mxu0
        %1359 = vmatprep.mubr.f32.mxu0 0.0
        %1360 = vmatmul.mubr.f32.gmra.mxu0 %v1288
        %v1361 = vpop.f32.mrf.mxu0
        %v1362 = vadd.f32 %v1282, %v1361
        %v1363 = vpop.f32.mrf.mxu0
        %1364 = vdwg.mxu0
        %v1365 = vadd.f32 %v1159, %v1357
        %v1366 = vadd.f32 %v1160, %v1362
        %v1367 = vsel %vm532, %v1365, 0.0
        %1368 = vadd.xlane.f32.xlu0 %v1367
        %v1369 = vpop.xlane.xlu0 %1368
        %v1370 = vsel %vm532, %v1366, 0.0
        %1371 = vadd.xlane.f32.xlu0 %v1370
        %v1372 = vpop.xlane.xlu0 %1371
        %v1373 = vmul.f32 %v1369, %v1128
        %v1374 = vmul.f32 %v1372, %v1128
        %v1375 = vsub.f32 %v1365, %v1373
        %v1376 = vsub.f32 %v1366, %v1374
        %v1377 = vmul.f32 %v1375, %v1375
        %v1378 = vmul.f32 %v1376, %v1376
        %v1379 = vsel %vm532, %v1377, 0.0
        %1380 = vadd.xlane.f32.xlu0 %v1379
        %v1381 = vpop.xlane.xlu0 %1380
        %v1382 = vsel %vm532, %v1378, 0.0
        %1383 = vadd.xlane.f32.xlu0 %v1382
        %v1384 = vpop.xlane.xlu0 %1383
        %v1385 = vmul.f32 %v1381, %v1128
        %v1386 = vmul.f32 %v1384, %v1128
        %v1387 = vadd.f32 %v1385, 1e-12
        %v1388 = vadd.f32 %v1386, 1e-12
        %v1389 = vrsqrt.pop %v1387
        %v1390 = vrsqrt.pop %v1388
        %v1391 = vmul.f32 %v1375, %v1389
        %v1392 = vmul.f32 %v1376, %v1390
        %v1393 = vlaneseq
        %v1394 = vshrl.u32 %v1393, 7
        %v1395 = vsub.s32 4, %v1394
        %v1396 = vrot.slane %v520, %v1395
        %v1397 = vmul.f32 %v1391, %v1396
        %v1398 = vmul.f32 %v1392, %v1396
        %v1399 = vlaneseq
        %v1400 = vshrl.u32 %v1399, 7
        %v1401 = vsub.s32 5, %v1400
        %v1402 = vrot.slane %v520, %v1401
        %v1403 = vadd.f32 %v1397, %v1402
        %v1404 = vadd.f32 %v1398, %v1402
        %1405 = vst.msk [vmem:[#allocation5] sm:$0xff] %vm532, %v1403
        %1406 = vst.msk [vmem:[#allocation5 + $0x8] sm:$0xff] %vm532, %v1404
        // Predicated region
        $region69: #{tpu_custom_call.1} parent=59 // pred_check
          %p1407 = pneg %p281
        $region70: #{tpu_custom_call.1} parent=59 // pred_check_branch
          %1409 = sbr.rel (%p1407) target = $region72
        $region71: #{tpu_custom_call.1} parent=59 // pred_region
          %s1411 = ssub.s32 256, 256
          %1412 = vsyncadd [#allocation4], %s1411
          %s1413 = sshll.u32 [#allocation5], 4
          %s1414 = int_to_ptr.vmem [resolvable:$true] %s1413
          %1419 = dma.vmem_to_hbm [thread:$0]  %s1414, 256, %s10, [#allocation4], 128, 128, 8
        $region72: #{tpu_custom_call.1} parent=59 // pred_fallthru
          _
        // Predicated region
        $region73: #{tpu_custom_call.1} parent=59 // pred_check
          %p1420 = pneg %p281
        $region74: #{tpu_custom_call.1} parent=59 // pred_check_branch
          %1422 = sbr.rel (%p1420) target = $region76
        $region75: #{tpu_custom_call.1} parent=59 // pred_region
          %1423 = dma.done [#allocation4], 256
        $region76: #{tpu_custom_call.1} parent=59 // pred_fallthru
          _
      $region60: #{tpu_custom_call.1} parent=5 // pred_fallthru
        _
      %p1424 = scmp.le.s32.totalorder 2, %s18
      // Predicated region
      $region77: #{tpu_custom_call.1} parent=5 // pred_check
        %p1425 = pneg %p1424
      $region78: #{tpu_custom_call.1} parent=5 // pred_check_branch
        %1427 = sbr.rel (%p1425) target = $region80
      $region79: #{tpu_custom_call.1} parent=5 // pred_region
        %s1428 = ssub.s32 %s18, 2
      $region80: #{tpu_custom_call.1} parent=5 // pred_fallthru
        _
    $region6: #{tpu_custom_call.1} parent=1 // loop_footer
      %s22 = sadd.s32 1, %s18
    $region7: #{tpu_custom_call.1} parent=1 // loop_footer_branch
      %17 = sbr.rel target = $region3
    $region8: #{tpu_custom_call.1} parent=1 // loop_exit
      _
    %1429 = vsyncpa [#allocation3], 1
    %s1430 = scalar_lea.sflag [#allocation3], 1
    %1431 = vsyncpa %s1430, 1
    %1432 = vsyncpa [#allocation4], 1
    %s1433 = scalar_lea.sflag [#allocation4], 1
    %1434 = vsyncpa %s1433, 1

</llo_original>
